<compile_context>
chip_gen: v5e
topology: v5e:2x2
jax: 0.10.0
libtpu: 0.0.40
codegen_flags: <defaults>
</compile_context>

<pallas_src>
import functools

import jax
import jax.numpy as jnp
from jax.experimental import pallas as pl
from jax.experimental.pallas import tpu as pltpu


def _round_up(x, m):
    return ((x + m - 1) // m) * m


def _cdiv(a, b):
    return -(-a // b)


# 0xFFFF0000 as int32: keeps sign + exponent + top-7 mantissa bits (a bf16-exact value).
_BF16_TRUNC_MASK = -65536


def _unpool_kernel(base_ref, slot_ref, gather_ref, f_ref, idx_ref, o_ref,
                   *, k, w_out, n_chunks):
    """Unpool one (tile_nc, H*W) slab into the cropped, flat (tile_nc, Hc*Wc) block."""
    vals = f_ref[...]                         # (T, HW)    feature values
    idxs = idx_ref[...].astype(jnp.int32)     # (T, HW)    flat pool indices (into h_out*w_out)
    base = base_ref[...]                      # (1, HW)    flat index of each window's top-left pixel
    slot = slot_ref[...]                      # (1, HcWc)  window slot of each (cropped) output pixel
    gop = gather_ref[...]                     # (HW, HcWc) shared one-hot gather operator (bf16)

    # Window-slot code of every input element (in [0, k*k) for valid pool indices).
    # delta = dr*w_out + dc with dr, dc in [0, k); use compares, not integer division.
    delta = idxs - base
    dr = jnp.zeros_like(delta)
    for j in range(1, k):
        dr = dr + (delta >= j * w_out).astype(jnp.int32)
    dc = delta - dr * w_out
    code = (dr * k + dc).astype(jnp.bfloat16)           # exact: valid codes < k*k <= 256

    # Exact bf16 chunks of the feature values (sum of chunks == value, bit-exact).
    if n_chunks == 1:                                    # bf16 features: one exact pass
        chunks = (vals.astype(jnp.bfloat16),)
    else:                                                # f32 features: 3 exact truncation chunks
        v32 = vals.astype(jnp.float32)
        u = pltpu.bitcast(v32, jnp.int32)
        a = pltpu.bitcast(u & _BF16_TRUNC_MASK, jnp.float32)
        r = v32 - a                                      # exact (shares sign/exponent with v32)
        b = pltpu.bitcast(pltpu.bitcast(r, jnp.int32) & _BF16_TRUNC_MASK, jnp.float32)
        c = r - b                                        # exact, <= 8 significant bits
        chunks = (a.astype(jnp.bfloat16), b.astype(jnp.bfloat16), c.astype(jnp.bfloat16))

    # Gather (nearest-neighbour upsample + crop) via the shared one-hot operator.
    # Each dot is a plain (T, HW) x (HW, HcWc) MXU matmul; the operator stays
    # resident in VMEM (constant index_map), so separate dots per field add no
    # operator traffic and avoid the sublane concat/slice copies a fused M-axis
    # concatenation would need.  One-hot column + f32 accumulation => exact.
    def gather(x):
        return jnp.dot(x, gop, preferred_element_type=jnp.float32)

    vals_up = gather(chunks[0])
    for ch in chunks[1:]:
        vals_up = vals_up + gather(ch)                   # exact f32 reconstruction
    code_up = gather(code)                               # exact small integers

    out = jnp.where(code_up == slot, vals_up, jnp.zeros_like(vals_up))
    o_ref[...] = out.astype(o_ref.dtype)


def _build_operators(H, W, k, w_out, h_crop, w_crop, x1, y1):
    """Shared gather operator + per-output-pixel slot row + per-input window base row."""
    hw = H * W
    oh = jnp.arange(h_crop, dtype=jnp.int32) + x1        # full-output row of each cropped row
    ow = jnp.arange(w_crop, dtype=jnp.int32) + y1        # full-output col of each cropped col
    src_q = ((oh // k)[:, None] * W + (ow // k)[None, :]).reshape(1, -1)       # (1, HcWc)
    gather_op = (jnp.arange(hw, dtype=jnp.int32)[:, None] == src_q).astype(jnp.bfloat16)
    slot_row = (((oh % k)[:, None] * k + (ow % k)[None, :])
                .reshape(1, -1).astype(jnp.float32))                            # (1, HcWc)
    base_row = (jnp.arange(H, dtype=jnp.int32)[:, None] * (k * w_out)
                + jnp.arange(W, dtype=jnp.int32)[None, :] * k).reshape(1, -1)   # (1, HW)
    return base_row, slot_row, gather_op


def _tpu_vmem_capacity_bytes():
    try:
        info = pltpu.get_tpu_info()
        cap = getattr(info, "vmem_capacity_bytes", None)
        if isinstance(cap, int) and cap > 0:
            return cap
    except Exception:
        pass
    return 64 * 1024 * 1024           # conservative default (v7x per-TensorCore VMEM)


def _num_tensorcores():
    objs = []
    try:
        objs.append(pltpu.get_tpu_info())
    except Exception:
        pass
    try:
        objs.append(jax.devices()[0])
    except Exception:
        pass
    for obj in objs:
        for attr in ("num_tensorcores", "num_cores", "core_count"):
            v = getattr(obj, attr, None)
            if isinstance(v, int) and v > 0:
                return v
    return 1                          # v5e / v6e: single TensorCore per chip


def _choose_tiling(nc, hw, hcwc, val_bytes, idx_bytes, out_bytes, n_chunks):
    """Pick tile_nc, padded N*C and a scoped-VMEM limit with (8,128) padding accounted."""
    hw_p = _round_up(hw, 128)
    hcwc_p = _round_up(hcwc, 128)
    cap = _tpu_vmem_capacity_bytes()
    budget = min(24 * 1024 * 1024, cap // 3)      # ~16-24 MiB on 128 MiB chips, less on v7x

    n_fields = n_chunks + 1
    # Resident (tile-independent) VMEM: gather operator + the two small rows (x2 buffers).
    fixed = 2 * (hw_p * hcwc_p * 2 + 8 * hcwc_p * 4 + 8 * hw_p * 4)
    # Per-plane VMEM: double-buffered in/out blocks + in-kernel temporaries.
    per_plane = (2 * hw_p * (val_bytes + idx_bytes)
                 + 2 * hcwc_p * out_bytes
                 + hw_p * (2 * n_fields + 8)
                 + hcwc_p * 4 * (n_fields + 1))

    if fixed + 8 * per_plane > max(budget, 3 * cap // 4):
        # TODO(synk): row-banded gather operator for very large feature planes.
        raise NotImplementedError("feature plane too large for the shared gather operator")

    avail = max(budget - fixed, 8 * per_plane)
    tile = max(8, min(1024, (avail // per_plane) // 8 * 8))
    tile = min(tile, _round_up(nc, 8))
    steps = _cdiv(nc, tile)
    cores = _num_tensorcores()
    if cores > 1 and steps > 1 and steps % cores:
        steps = _round_up(steps, cores)           # balance grid steps across TensorCores (v7x)
    tile = _round_up(_cdiv(nc, steps), 8)
    nc_pad = tile * steps

    need = fixed + tile * per_plane + (4 << 20)
    vmem_limit = min(max(need, 32 << 20), 64 << 20, 3 * cap // 4)
    return tile, nc_pad, int(vmem_limit)


def crop_max_unpool2d(f_maps, indices, *, kernel_size, stride, padding=None, tile_nc=None):
    """Equivalent of CropMaxUnpool2d(kernel_size, stride)(f_maps, indices, padding)."""
    if not isinstance(kernel_size, int) or not isinstance(stride, int):
        raise NotImplementedError("only square integer kernel_size/stride are supported")
    if stride != kernel_size:
        # TODO(synk): overlapping unpool (stride != kernel_size) needs a true scatter with
        # PyTorch's collision semantics; not implemented in the Pallas path.
        raise NotImplementedError("Pallas path requires stride == kernel_size")

    N, C, H, W = f_maps.shape
    k = kernel_size
    h_out = (H - 1) * stride + k
    w_out = (W - 1) * stride + k
    if padding is None:
        x1, y1 = 0, 0
    else:
        x1, y1 = int(padding[2]), int(padding[0])   # same slicing as the torch module
    h_crop, w_crop = h_out - x1, w_out - y1

    out_dtype = f_maps.dtype
    if not jnp.issubdtype(out_dtype, jnp.floating):
        # TODO(synk): integer feature maps round-trip through f32 (exact only below 2^24).
        f_maps = f_maps.astype(jnp.float32)

    if f_maps.dtype == jnp.bfloat16:
        n_chunks = 1                                 # single exact bf16 pass
        kernel_out_dtype = jnp.bfloat16
    else:
        f_maps = f_maps.astype(jnp.float32)
        n_chunks = 3                                 # exact 3-chunk bf16 truncation split
        kernel_out_dtype = jnp.float32 if out_dtype != jnp.float32 else out_dtype

    hw, hcwc = H * W, h_crop * w_crop
    nc = N * C

    # Lane-dense flat layout (free reshapes on dense HBM layouts).
    f2 = f_maps.reshape(nc, hw)
    idx_dtype = jnp.int16 if h_out * w_out <= 32767 else jnp.int32   # halve index HBM traffic
    i2 = indices.reshape(nc, hw).astype(idx_dtype)

    auto_tile, auto_pad, vmem_limit = _choose_tiling(
        nc, hw, hcwc, f2.dtype.itemsize, jnp.dtype(idx_dtype).itemsize,
        jnp.dtype(kernel_out_dtype).itemsize, n_chunks)
    if tile_nc is None:
        tile, nc_pad = auto_tile, auto_pad
    else:
        tile = int(tile_nc)
        nc_pad = _round_up(nc, tile)

    if nc_pad != nc:                                # pad N*C instead of a divisor constraint
        pad = nc_pad - nc
        f2 = jnp.pad(f2, ((0, pad), (0, 0)))
        i2 = jnp.pad(i2, ((0, pad), (0, 0)))

    base_row, slot_row, gather_op = _build_operators(H, W, k, w_out, h_crop, w_crop, x1, y1)

    kernel = functools.partial(_unpool_kernel, k=k, w_out=w_out, n_chunks=n_chunks)
    out = pl.pallas_call(
        kernel,
        out_shape=jax.ShapeDtypeStruct((nc_pad, hcwc), kernel_out_dtype),
        grid=(nc_pad // tile,),
        in_specs=[
            pl.BlockSpec((1, hw), lambda i: (0, 0)),          # window-base row (loaded once)
            pl.BlockSpec((1, hcwc), lambda i: (0, 0)),        # output slot row (loaded once)
            pl.BlockSpec((hw, hcwc), lambda i: (0, 0)),       # shared gather operator (loaded once)
            pl.BlockSpec((tile, hw), lambda i: (i, 0)),       # feature values
            pl.BlockSpec((tile, hw), lambda i: (i, 0)),       # pool indices
        ],
        out_specs=pl.BlockSpec((tile, hcwc), lambda i: (i, 0)),
        compiler_params=pltpu.CompilerParams(
            dimension_semantics=("parallel",),
            vmem_limit_bytes=vmem_limit,
        ),
    )(base_row, slot_row, gather_op, f2, i2)

    if nc_pad != nc:
        out = out[:nc]
    out = out.reshape(N, C, h_crop, w_crop)
    if out.dtype != out_dtype:
        out = out.astype(out_dtype)
    return out


def _reference_crop_max_unpool2d(f_maps, indices, *, kernel_size, stride, padding=None):
    """Pure-JAX reference (scatter) matching torch.nn.MaxUnpool2d + crop."""
    N, C, H, W = f_maps.shape
    h_out = (H - 1) * stride + kernel_size
    w_out = (W - 1) * stride + kernel_size
    out = jnp.zeros((N * C, h_out * w_out), f_maps.dtype)
    nc = jnp.arange(N * C)
    out = out.at[nc[:, None], indices.reshape(N * C, H * W)].set(
        f_maps.reshape(N * C, H * W))
    out = out.reshape(N, C, h_out, w_out)
    if padding is not None:
        out = out[:, :, padding[2]:, padding[0]:]
    return out


if __name__ == "__main__":
    N, C, H, W = 2, 4, 16, 16
    kernel_size = stride = 2
    h_out = (H - 1) * stride + kernel_size
    w_out = (W - 1) * stride + kernel_size

    key = jax.random.PRNGKey(0)
    k1, k2, k3 = jax.random.split(key, 3)
    # Full-precision f32 features: the exact bf16-chunk split keeps the unpool
    # copy bit-exact, so no snapping to bf16-representable values is needed.
    f_maps = jax.random.normal(k1, (N, C, H, W), dtype=jnp.float32)

    # Valid max-pool indices: each input element points inside its own
    # kernel_size x kernel_size window of the (h_out, w_out) output plane.
    r = jax.random.randint(k2, (N, C, H, W), 0, kernel_size)
    s = jax.random.randint(k3, (N, C, H, W), 0, kernel_size)
    ih = jnp.arange(H)[:, None]
    iw = jnp.arange(W)[None, :]
    indices = ((ih * stride + r) * w_out + (iw * stride + s)).astype(jnp.int32)

    for padding in (None, [1, 1, 2, 2]):
        out = crop_max_unpool2d(f_maps, indices, kernel_size=kernel_size,
                                stride=stride, padding=padding)
        out = jax.block_until_ready(out)
        ref = _reference_crop_max_unpool2d(f_maps, indices, kernel_size=kernel_size,
                                           stride=stride, padding=padding)
        assert out.shape == ref.shape, (padding, out.shape, ref.shape)
        assert bool(jnp.array_equal(out, ref)), f"mismatch (padding={padding})"

    # bf16 path (single exact value pass) is bit-exact as well.
    out_bf = crop_max_unpool2d(f_maps.astype(jnp.bfloat16), indices,
                               kernel_size=kernel_size, stride=stride,
                               padding=[1, 1, 2, 2])
    out_bf = jax.block_until_ready(out_bf)
    ref_bf = _reference_crop_max_unpool2d(f_maps.astype(jnp.bfloat16), indices,
                                          kernel_size=kernel_size, stride=stride,
                                          padding=[1, 1, 2, 2])
    assert bool(jnp.array_equal(out_bf, ref_bf)), "bf16 mismatch"

    print("KERNEL_OK")
</pallas_src>

<mosaic_0001>
module attributes {stable_mosaic.version = 11 : i64} {
  func.func @_unpool_kernel(%arg0: i32, %arg1: memref<1x256xi32, #tpu.memory_space<vmem>>, %arg2: memref<1x1024xf32, #tpu.memory_space<vmem>>, %arg3: memref<256x1024xbf16, #tpu.memory_space<vmem>>, %arg4: memref<8x256xf32, #tpu.memory_space<vmem>>, %arg5: memref<8x256xi16, #tpu.memory_space<vmem>>, %arg6: memref<8x1024xf32, #tpu.memory_space<vmem>>) attributes {dimension_semantics = [#tpu.dimension_semantics<parallel>], iteration_bounds = array<i64: 1>, scalar_prefetch = 0 : i64, scratch_operands = 0 : i64, tpu.core_type = #tpu.core_type<tc>, window_params = [{pipeline_mode = #tpu.pipeline_mode<synchronous>, transform_indices = @transform_0, window_bounds = array<i64: 1, 256>}, {pipeline_mode = #tpu.pipeline_mode<synchronous>, transform_indices = @transform_1, window_bounds = array<i64: 1, 1024>}, {pipeline_mode = #tpu.pipeline_mode<synchronous>, transform_indices = @transform_2, window_bounds = array<i64: 256, 1024>}, {transform_indices = @transform_3, window_bounds = array<i64: 8, 256>}, {transform_indices = @transform_4, window_bounds = array<i64: 8, 256>}, {transform_indices = @transform_5, window_bounds = array<i64: 8, 1024>}]} {
    %c0 = arith.constant 0 : index
    %c0_0 = arith.constant 0 : index
    %0 = vector.load %arg4[%c0, %c0_0] : memref<8x256xf32, #tpu.memory_space<vmem>>, vector<8x256xf32>
    %c0_1 = arith.constant 0 : index
    %c0_2 = arith.constant 0 : index
    %1 = vector.load %arg5[%c0_1, %c0_2] : memref<8x256xi16, #tpu.memory_space<vmem>>, vector<8x256xi16>
    %2 = arith.extsi %1 : vector<8x256xi16> to vector<8x256xi32>
    %c0_3 = arith.constant 0 : index
    %c0_4 = arith.constant 0 : index
    %3 = vector.load %arg1[%c0_3, %c0_4] : memref<1x256xi32, #tpu.memory_space<vmem>>, vector<1x256xi32>
    %c0_5 = arith.constant 0 : index
    %c0_6 = arith.constant 0 : index
    %4 = vector.load %arg2[%c0_5, %c0_6] : memref<1x1024xf32, #tpu.memory_space<vmem>>, vector<1x1024xf32>
    %c0_7 = arith.constant 0 : index
    %c0_8 = arith.constant 0 : index
    %5 = vector.load %arg3[%c0_7, %c0_8] : memref<256x1024xbf16, #tpu.memory_space<vmem>>, vector<256x1024xbf16>
    %6 = vector.broadcast %3 : vector<1x256xi32> to vector<8x256xi32>
    %7 = arith.subi %2, %6 : vector<8x256xi32>
    %c0_i32 = arith.constant 0 : i32
    %8 = vector.broadcast %c0_i32 : i32 to vector<8x256xi32>
    %c32_i32 = arith.constant 32 : i32
    %9 = vector.broadcast %c32_i32 : i32 to vector<8x256xi32>
    %10 = arith.cmpi sge, %7, %9 : vector<8x256xi32>
    %11 = arith.extui %10 : vector<8x256xi1> to vector<8x256xi32>
    %12 = arith.addi %8, %11 : vector<8x256xi32>
    %c32_i32_9 = arith.constant 32 : i32
    %13 = vector.broadcast %c32_i32_9 : i32 to vector<8x256xi32>
    %14 = arith.muli %12, %13 : vector<8x256xi32>
    %15 = arith.subi %7, %14 : vector<8x256xi32>
    %c2_i32 = arith.constant 2 : i32
    %16 = vector.broadcast %c2_i32 : i32 to vector<8x256xi32>
    %17 = arith.muli %12, %16 : vector<8x256xi32>
    %18 = arith.addi %17, %15 : vector<8x256xi32>
    %19 = arith.sitofp %18 : vector<8x256xi32> to vector<8x256xbf16>
    %20 = tpu.bitcast %0 : vector<8x256xf32> -> vector<8x256xi32>
    %c-65536_i32 = arith.constant -65536 : i32
    %21 = vector.broadcast %c-65536_i32 : i32 to vector<8x256xi32>
    %22 = arith.andi %20, %21 : vector<8x256xi32>
    %23 = tpu.bitcast %22 : vector<8x256xi32> -> vector<8x256xf32>
    %24 = arith.subf %0, %23 : vector<8x256xf32>
    %25 = tpu.bitcast %24 : vector<8x256xf32> -> vector<8x256xi32>
    %c-65536_i32_10 = arith.constant -65536 : i32
    %26 = vector.broadcast %c-65536_i32_10 : i32 to vector<8x256xi32>
    %27 = arith.andi %25, %26 : vector<8x256xi32>
    %28 = tpu.bitcast %27 : vector<8x256xi32> -> vector<8x256xf32>
    %29 = arith.subf %24, %28 : vector<8x256xf32>
    %30 = arith.truncf %23 : vector<8x256xf32> to vector<8x256xbf16>
    %31 = arith.truncf %28 : vector<8x256xf32> to vector<8x256xbf16>
    %32 = arith.truncf %29 : vector<8x256xf32> to vector<8x256xbf16>
    %cst = arith.constant dense<0.000000e+00> : vector<8x1024xf32>
    %33 = tpu.matmul %30, %5, %cst {dimension_numbers = #tpu.dot_dimension_numbers<[1], [0], [0], [1], [0, 0, 1, 1], [], []>} : vector<8x256xbf16>, vector<256x1024xbf16>, vector<8x1024xf32> -> vector<8x1024xf32>
    %cst_11 = arith.constant dense<0.000000e+00> : vector<8x1024xf32>
    %34 = tpu.matmul %31, %5, %cst_11 {dimension_numbers = #tpu.dot_dimension_numbers<[1], [0], [0], [1], [0, 0, 1, 1], [], []>} : vector<8x256xbf16>, vector<256x1024xbf16>, vector<8x1024xf32> -> vector<8x1024xf32>
    %35 = arith.addf %33, %34 : vector<8x1024xf32>
    %cst_12 = arith.constant dense<0.000000e+00> : vector<8x1024xf32>
    %36 = tpu.matmul %32, %5, %cst_12 {dimension_numbers = #tpu.dot_dimension_numbers<[1], [0], [0], [1], [0, 0, 1, 1], [], []>} : vector<8x256xbf16>, vector<256x1024xbf16>, vector<8x1024xf32> -> vector<8x1024xf32>
    %37 = arith.addf %35, %36 : vector<8x1024xf32>
    %cst_13 = arith.constant dense<0.000000e+00> : vector<8x1024xf32>
    %38 = tpu.matmul %19, %5, %cst_13 {dimension_numbers = #tpu.dot_dimension_numbers<[1], [0], [0], [1], [0, 0, 1, 1], [], []>} : vector<8x256xbf16>, vector<256x1024xbf16>, vector<8x1024xf32> -> vector<8x1024xf32>
    %39 = vector.broadcast %4 : vector<1x1024xf32> to vector<8x1024xf32>
    %40 = arith.cmpf oeq, %38, %39 : vector<8x1024xf32>
    %cst_14 = arith.constant 0.000000e+00 : f32
    %41 = vector.broadcast %cst_14 : f32 to vector<8x1024xf32>
    %42 = arith.select %40, %37, %41 : vector<8x1024xi1>, vector<8x1024xf32>
    %c0_15 = arith.constant 0 : index
    %c0_16 = arith.constant 0 : index
    %43 = vector.load %arg6[%c0_15, %c0_16] : memref<8x1024xf32, #tpu.memory_space<vmem>>, vector<8x1024xf32>
    tpu.vector_store %arg6[%c0_15, %c0_16], %42 {strides = array<i32>} : memref<8x1024xf32, #tpu.memory_space<vmem>>, vector<8x1024xf32>,
    return
  }
  func.func @transform_0(%arg0: i32) -> (i32, i32) {
    %c0_i32 = arith.constant 0 : i32
    %c0_i32_0 = arith.constant 0 : i32
    %c0_i32_1 = arith.constant 0 : i32
    return %c0_i32, %c0_i32_0 : i32, i32
  }
  func.func @transform_1(%arg0: i32) -> (i32, i32) {
    %c0_i32 = arith.constant 0 : i32
    %c0_i32_0 = arith.constant 0 : i32
    %c0_i32_1 = arith.constant 0 : i32
    return %c0_i32, %c0_i32_0 : i32, i32
  }
  func.func @transform_2(%arg0: i32) -> (i32, i32) {
    %c0_i32 = arith.constant 0 : i32
    %c0_i32_0 = arith.constant 0 : i32
    %c0_i32_1 = arith.constant 0 : i32
    return %c0_i32, %c0_i32_0 : i32, i32
  }
  func.func @transform_3(%arg0: i32) -> (i32, i32) {
    %c0_i32 = arith.constant 0 : i32
    %c0_i32_0 = arith.constant 0 : i32
    return %arg0, %c0_i32 : i32, i32
  }
  func.func @transform_4(%arg0: i32) -> (i32, i32) {
    %c0_i32 = arith.constant 0 : i32
    %c0_i32_0 = arith.constant 0 : i32
    return %arg0, %c0_i32 : i32, i32
  }
  func.func @transform_5(%arg0: i32) -> (i32, i32) {
    %c0_i32 = arith.constant 0 : i32
    %c0_i32_0 = arith.constant 0 : i32
    return %arg0, %c0_i32 : i32, i32
  }
}

</mosaic_0001>

<llo_original>
// kernel: tpu_custom_call.1
$region0: #{tpu_custom_call.1}
  #allocation0 [shape = 'u32[]', space=smem, size = 0x4, offset = 0x4, fixed_abs, tag = 'smem constant byte address 0x4 - core index']
  #allocation1 [shape = 'u32[72,128]{1,0:T(1,128)}', space=vmem, size = 0x9000, scoped, tag = 'internal scratch']
  %s0 = inlined_call_operand.hbm [shape: s32[1,256], index: 0, kind: input, shape index: {}]
  %s1 = inlined_call_operand.hbm [shape: f32[1,1024], index: 1, kind: input, shape index: {}]
  %s2 = inlined_call_operand.hbm [shape: bf16[256,1024], index: 2, kind: input, shape index: {}]
  %s3 = inlined_call_operand.hbm [shape: f32[8,256], index: 3, kind: input, shape index: {}]
  %s4 = inlined_call_operand.hbm [shape: s16[8,256], index: 4, kind: input, shape index: {}]
  %s5 = inlined_call_operand.hbm [shape: f32[8,1024], index: 5, kind: output, shape index: {}]
  %s6 = sld [smem:[#allocation0]]
  $region50: #{tpu_custom_call.1} parent=0
    _
  %s8 = ssub.s32 1, %s6
  %s9 = scalar_select 0, %s8, %s6
  $region1: #{tpu_custom_call.1} parent=0
    #allocation2 [shape = 'u8[1024]{0}', space=vmem, size = 0x400, scoped, tag = 'input window, operand 0, single buffered']
    #allocation3 [shape = 's32[1]{0}', space=sflag, size = 0x4, scoped, tag = 'scoped memory for tpu_custom_call.1']
    #allocation4 [shape = 's32[1]{0}', space=sflag, size = 0x4, scoped, tag = 'scoped memory for tpu_custom_call.1']
    #allocation5 [shape = 'u8[4096]{0}', space=vmem, size = 0x1000, scoped, tag = 'input window, operand 1, single buffered']
    #allocation6 [shape = 's32[1]{0}', space=sflag, size = 0x4, scoped, tag = 'scoped memory for tpu_custom_call.1']
    #allocation7 [shape = 'u8[524288]{0}', space=vmem, size = 0x80000, scoped, tag = 'input window, operand 2, single buffered']
    #allocation8 [shape = 'u8[8192]{0}', space=vmem, size = 0x2000, scoped, tag = 'input window, operand 3, single buffered']
    #allocation9 [shape = 's32[1]{0}', space=sflag, size = 0x4, scoped, tag = 'scoped memory for tpu_custom_call.1']
    #allocation10 [shape = 'u8[4096]{0}', space=vmem, size = 0x1000, scoped, tag = 'input window, operand 4, single buffered']
    #allocation11 [shape = 'u8[32768]{0}', space=vmem, size = 0x8000, scoped, tag = 'output window, operand 0, single buffered']
    %10 = vsyncpa [#allocation3], 0
    %11 = vsyncpa [#allocation6], 0
    %12 = vsyncpa [#allocation9], 0
    %13 = vsyncpa [#allocation4], 0
    // Predicated region
    $region2: #{tpu_custom_call.1} parent=1 // pred_check
      _
    $region3: #{tpu_custom_call.1} parent=1 // pred_check_branch
      %15 = sbr.rel (0) target = $region5
    $region4: #{tpu_custom_call.1} parent=1 // pred_region
      %17 = vsyncadd [#allocation3], 0
      %s19 = sshll.u32 %s0, 4
      %s20 = int_to_ptr.hbm [resolvable:$true] %s19
      %s21 = sshll.u32 [#allocation2], 4
      %s22 = int_to_ptr.vmem [resolvable:$true] %s21
      %24 = dma.hbm_to_vmem [thread:$0]  %s20, 32, %s22, [#allocation3]
    $region5: #{tpu_custom_call.1} parent=1 // pred_fallthru
      _
    // Predicated region
    $region6: #{tpu_custom_call.1} parent=1 // pred_check
      _
    $region7: #{tpu_custom_call.1} parent=1 // pred_check_branch
      %26 = sbr.rel (0) target = $region9
    $region8: #{tpu_custom_call.1} parent=1 // pred_region
      %28 = vsyncadd [#allocation6], 0
      %s30 = sshll.u32 %s1, 4
      %s31 = int_to_ptr.hbm [resolvable:$true] %s30
      %s32 = sshll.u32 [#allocation5], 4
      %s33 = int_to_ptr.vmem [resolvable:$true] %s32
      %35 = dma.hbm_to_vmem [thread:$0]  %s31, 128, %s33, [#allocation6]
    $region9: #{tpu_custom_call.1} parent=1 // pred_fallthru
      _
    // Predicated region
    $region10: #{tpu_custom_call.1} parent=1 // pred_check
      _
    $region11: #{tpu_custom_call.1} parent=1 // pred_check_branch
      %37 = sbr.rel (0) target = $region13
    $region12: #{tpu_custom_call.1} parent=1 // pred_region
      %39 = vsyncadd [#allocation6], 0
      %s40 = sshll.u32 %s2, 4
      %s41 = int_to_ptr.hbm [resolvable:$true] %s40
      %s42 = sshll.u32 [#allocation7], 4
      %s43 = int_to_ptr.vmem [resolvable:$true] %s42
      %48 = dma.hbm_to_vmem [thread:$0]  %s41, 16384, %s43, [#allocation6], 512, 512, 32
    $region13: #{tpu_custom_call.1} parent=1 // pred_fallthru
      _
    // Predicated region
    $region14: #{tpu_custom_call.1} parent=1 // pred_check
      _
    $region15: #{tpu_custom_call.1} parent=1 // pred_check_branch
      %50 = sbr.rel (0) target = $region17
    $region16: #{tpu_custom_call.1} parent=1 // pred_region
      %52 = vsyncadd [#allocation9], 0
      %s54 = sshll.u32 %s3, 4
      %s55 = int_to_ptr.hbm [resolvable:$true] %s54
      %s56 = sshll.u32 [#allocation8], 4
      %s57 = int_to_ptr.vmem [resolvable:$true] %s56
      %59 = dma.hbm_to_vmem [thread:$0]  %s55, 256, %s57, [#allocation9]
    $region17: #{tpu_custom_call.1} parent=1 // pred_fallthru
      _
    // Predicated region
    $region18: #{tpu_custom_call.1} parent=1 // pred_check
      _
    $region19: #{tpu_custom_call.1} parent=1 // pred_check_branch
      %61 = sbr.rel (0) target = $region21
    $region20: #{tpu_custom_call.1} parent=1 // pred_region
      %63 = vsyncadd [#allocation9], 0
      %s65 = sshll.u32 %s4, 4
      %s66 = int_to_ptr.hbm [resolvable:$true] %s65
      %s67 = sshll.u32 [#allocation10], 4
      %s68 = int_to_ptr.vmem [resolvable:$true] %s67
      %70 = dma.hbm_to_vmem [thread:$0]  %s66, 128, %s68, [#allocation9]
    $region21: #{tpu_custom_call.1} parent=1 // pred_fallthru
      _
    // Predicated region
    $region22: #{tpu_custom_call.1} parent=1 // pred_check
      _
    $region23: #{tpu_custom_call.1} parent=1 // pred_check_branch
      %72 = sbr.rel (0) target = $region25
    $region24: #{tpu_custom_call.1} parent=1 // pred_region
      %74 = dma.done [#allocation3], 32
    $region25: #{tpu_custom_call.1} parent=1 // pred_fallthru
      _
    // Predicated region
    $region26: #{tpu_custom_call.1} parent=1 // pred_check
      _
    $region27: #{tpu_custom_call.1} parent=1 // pred_check_branch
      %76 = sbr.rel (0) target = $region29
    $region28: #{tpu_custom_call.1} parent=1 // pred_region
      %78 = dma.done [#allocation6], 128
    $region29: #{tpu_custom_call.1} parent=1 // pred_fallthru
      _
    // Predicated region
    $region30: #{tpu_custom_call.1} parent=1 // pred_check
      _
    $region31: #{tpu_custom_call.1} parent=1 // pred_check_branch
      %80 = sbr.rel (0) target = $region33
    $region32: #{tpu_custom_call.1} parent=1 // pred_region
      %82 = dma.done [#allocation6], 16384
    $region33: #{tpu_custom_call.1} parent=1 // pred_fallthru
      _
    // Predicated region
    $region34: #{tpu_custom_call.1} parent=1 // pred_check
      _
    $region35: #{tpu_custom_call.1} parent=1 // pred_check_branch
      %84 = sbr.rel (0) target = $region37
    $region36: #{tpu_custom_call.1} parent=1 // pred_region
      %86 = dma.done [#allocation9], 256
    $region37: #{tpu_custom_call.1} parent=1 // pred_fallthru
      _
    // Predicated region
    $region38: #{tpu_custom_call.1} parent=1 // pred_check
      _
    $region39: #{tpu_custom_call.1} parent=1 // pred_check_branch
      %88 = sbr.rel (0) target = $region41
    $region40: #{tpu_custom_call.1} parent=1 // pred_region
      %90 = dma.done [#allocation9], 128
    $region41: #{tpu_custom_call.1} parent=1 // pred_fallthru
      _
    %v91 = vld [vmem:[#allocation8] sm:$0xff]
    %v92 = vld [vmem:[#allocation8 + $0x8] sm:$0xff]
    %v93 = vld [vmem:[#allocation10] sm:$0xff]
    %v94 = vunpack.c.l.b16 %v93
    %v95 = vunpack.c.h.b16 %v93
    %v96 = vld [vmem:[#allocation2] sm:$0x3]
    %v97 = vld [vmem:[#allocation5] sm:$0xff]
    %v98 = vld [vmem:[#allocation7] sm:$0xff]
    %v99 = vld [vmem:[#allocation7 + $0x8] sm:$0xff]
    %v100 = vld [vmem:[#allocation7 + $0x10] sm:$0xff]
    %v101 = vld [vmem:[#allocation7 + $0x18] sm:$0xff]
    %v102 = vld [vmem:[#allocation7 + $0x20] sm:$0xff]
    %v103 = vld [vmem:[#allocation7 + $0x28] sm:$0xff]
    %v104 = vld [vmem:[#allocation7 + $0x30] sm:$0xff]
    %v105 = vld [vmem:[#allocation7 + $0x38] sm:$0xff]
    %v106 = vld [vmem:[#allocation7 + $0x40] sm:$0xff]
    %v107 = vld [vmem:[#allocation7 + $0x48] sm:$0xff]
    %v108 = vld [vmem:[#allocation7 + $0x50] sm:$0xff]
    %v109 = vld [vmem:[#allocation7 + $0x58] sm:$0xff]
    %v110 = vld [vmem:[#allocation7 + $0x60] sm:$0xff]
    %v111 = vld [vmem:[#allocation7 + $0x68] sm:$0xff]
    %v112 = vld [vmem:[#allocation7 + $0x70] sm:$0xff]
    %v113 = vld [vmem:[#allocation7 + $0x78] sm:$0xff]
    %v114 = vld [vmem:[#allocation7 + $0x80] sm:$0xff]
    %v115 = vld [vmem:[#allocation7 + $0x88] sm:$0xff]
    %v116 = vld [vmem:[#allocation7 + $0x90] sm:$0xff]
    %v117 = vld [vmem:[#allocation7 + $0x98] sm:$0xff]
    %v118 = vld [vmem:[#allocation7 + $0xa0] sm:$0xff]
    %v119 = vld [vmem:[#allocation7 + $0xa8] sm:$0xff]
    %v120 = vld [vmem:[#allocation7 + $0xb0] sm:$0xff]
    %v121 = vld [vmem:[#allocation7 + $0xb8] sm:$0xff]
    %v122 = vld [vmem:[#allocation7 + $0xc0] sm:$0xff]
    %v123 = vld [vmem:[#allocation7 + $0xc8] sm:$0xff]
    %v124 = vld [vmem:[#allocation7 + $0xd0] sm:$0xff]
    %v125 = vld [vmem:[#allocation7 + $0xd8] sm:$0xff]
    %v126 = vld [vmem:[#allocation7 + $0xe0] sm:$0xff]
    %v127 = vld [vmem:[#allocation7 + $0xe8] sm:$0xff]
    %v128 = vld [vmem:[#allocation7 + $0xf0] sm:$0xff]
    %v129 = vld [vmem:[#allocation7 + $0xf8] sm:$0xff]
    %v130 = vld [vmem:[#allocation7 + $0x100] sm:$0xff]
    %v131 = vld [vmem:[#allocation7 + $0x108] sm:$0xff]
    %v132 = vld [vmem:[#allocation7 + $0x110] sm:$0xff]
    %v133 = vld [vmem:[#allocation7 + $0x118] sm:$0xff]
    %v134 = vld [vmem:[#allocation7 + $0x120] sm:$0xff]
    %v135 = vld [vmem:[#allocation7 + $0x128] sm:$0xff]
    %v136 = vld [vmem:[#allocation7 + $0x130] sm:$0xff]
    %v137 = vld [vmem:[#allocation7 + $0x138] sm:$0xff]
    %v138 = vld [vmem:[#allocation7 + $0x140] sm:$0xff]
    %v139 = vld [vmem:[#allocation7 + $0x148] sm:$0xff]
    %v140 = vld [vmem:[#allocation7 + $0x150] sm:$0xff]
    %v141 = vld [vmem:[#allocation7 + $0x158] sm:$0xff]
    %v142 = vld [vmem:[#allocation7 + $0x160] sm:$0xff]
    %v143 = vld [vmem:[#allocation7 + $0x168] sm:$0xff]
    %v144 = vld [vmem:[#allocation7 + $0x170] sm:$0xff]
    %v145 = vld [vmem:[#allocation7 + $0x178] sm:$0xff]
    %v146 = vld [vmem:[#allocation7 + $0x180] sm:$0xff]
    %v147 = vld [vmem:[#allocation7 + $0x188] sm:$0xff]
    %v148 = vld [vmem:[#allocation7 + $0x190] sm:$0xff]
    %v149 = vld [vmem:[#allocation7 + $0x198] sm:$0xff]
    %v150 = vld [vmem:[#allocation7 + $0x1a0] sm:$0xff]
    %v151 = vld [vmem:[#allocation7 + $0x1a8] sm:$0xff]
    %v152 = vld [vmem:[#allocation7 + $0x1b0] sm:$0xff]
    %v153 = vld [vmem:[#allocation7 + $0x1b8] sm:$0xff]
    %v154 = vld [vmem:[#allocation7 + $0x1c0] sm:$0xff]
    %v155 = vld [vmem:[#allocation7 + $0x1c8] sm:$0xff]
    %v156 = vld [vmem:[#allocation7 + $0x1d0] sm:$0xff]
    %v157 = vld [vmem:[#allocation7 + $0x1d8] sm:$0xff]
    %v158 = vld [vmem:[#allocation7 + $0x1e0] sm:$0xff]
    %v159 = vld [vmem:[#allocation7 + $0x1e8] sm:$0xff]
    %v160 = vld [vmem:[#allocation7 + $0x1f0] sm:$0xff]
    %v161 = vld [vmem:[#allocation7 + $0x1f8] sm:$0xff]
    %v162 = vld [vmem:[#allocation7 + $0x200] sm:$0xff]
    %v163 = vld [vmem:[#allocation7 + $0x208] sm:$0xff]
    %v164 = vld [vmem:[#allocation7 + $0x210] sm:$0xff]
    %v165 = vld [vmem:[#allocation7 + $0x218] sm:$0xff]
    %v166 = vld [vmem:[#allocation7 + $0x220] sm:$0xff]
    %v167 = vld [vmem:[#allocation7 + $0x228] sm:$0xff]
    %v168 = vld [vmem:[#allocation7 + $0x230] sm:$0xff]
    %v169 = vld [vmem:[#allocation7 + $0x238] sm:$0xff]
    %v170 = vld [vmem:[#allocation7 + $0x240] sm:$0xff]
    %v171 = vld [vmem:[#allocation7 + $0x248] sm:$0xff]
    %v172 = vld [vmem:[#allocation7 + $0x250] sm:$0xff]
    %v173 = vld [vmem:[#allocation7 + $0x258] sm:$0xff]
    %v174 = vld [vmem:[#allocation7 + $0x260] sm:$0xff]
    %v175 = vld [vmem:[#allocation7 + $0x268] sm:$0xff]
    %v176 = vld [vmem:[#allocation7 + $0x270] sm:$0xff]
    %v177 = vld [vmem:[#allocation7 + $0x278] sm:$0xff]
    %v178 = vld [vmem:[#allocation7 + $0x280] sm:$0xff]
    %v179 = vld [vmem:[#allocation7 + $0x288] sm:$0xff]
    %v180 = vld [vmem:[#allocation7 + $0x290] sm:$0xff]
    %v181 = vld [vmem:[#allocation7 + $0x298] sm:$0xff]
    %v182 = vld [vmem:[#allocation7 + $0x2a0] sm:$0xff]
    %v183 = vld [vmem:[#allocation7 + $0x2a8] sm:$0xff]
    %v184 = vld [vmem:[#allocation7 + $0x2b0] sm:$0xff]
    %v185 = vld [vmem:[#allocation7 + $0x2b8] sm:$0xff]
    %v186 = vld [vmem:[#allocation7 + $0x2c0] sm:$0xff]
    %v187 = vld [vmem:[#allocation7 + $0x2c8] sm:$0xff]
    %v188 = vld [vmem:[#allocation7 + $0x2d0] sm:$0xff]
    %v189 = vld [vmem:[#allocation7 + $0x2d8] sm:$0xff]
    %v190 = vld [vmem:[#allocation7 + $0x2e0] sm:$0xff]
    %v191 = vld [vmem:[#allocation7 + $0x2e8] sm:$0xff]
    %v192 = vld [vmem:[#allocation7 + $0x2f0] sm:$0xff]
    %v193 = vld [vmem:[#allocation7 + $0x2f8] sm:$0xff]
    %v194 = vld [vmem:[#allocation7 + $0x300] sm:$0xff]
    %v195 = vld [vmem:[#allocation7 + $0x308] sm:$0xff]
    %v196 = vld [vmem:[#allocation7 + $0x310] sm:$0xff]
    %v197 = vld [vmem:[#allocation7 + $0x318] sm:$0xff]
    %v198 = vld [vmem:[#allocation7 + $0x320] sm:$0xff]
    %v199 = vld [vmem:[#allocation7 + $0x328] sm:$0xff]
    %v200 = vld [vmem:[#allocation7 + $0x330] sm:$0xff]
    %v201 = vld [vmem:[#allocation7 + $0x338] sm:$0xff]
    %v202 = vld [vmem:[#allocation7 + $0x340] sm:$0xff]
    %v203 = vld [vmem:[#allocation7 + $0x348] sm:$0xff]
    %v204 = vld [vmem:[#allocation7 + $0x350] sm:$0xff]
    %v205 = vld [vmem:[#allocation7 + $0x358] sm:$0xff]
    %v206 = vld [vmem:[#allocation7 + $0x360] sm:$0xff]
    %v207 = vld [vmem:[#allocation7 + $0x368] sm:$0xff]
    %v208 = vld [vmem:[#allocation7 + $0x370] sm:$0xff]
    %v209 = vld [vmem:[#allocation7 + $0x378] sm:$0xff]
    %v210 = vld [vmem:[#allocation7 + $0x380] sm:$0xff]
    %v211 = vld [vmem:[#allocation7 + $0x388] sm:$0xff]
    %v212 = vld [vmem:[#allocation7 + $0x390] sm:$0xff]
    %v213 = vld [vmem:[#allocation7 + $0x398] sm:$0xff]
    %v214 = vld [vmem:[#allocation7 + $0x3a0] sm:$0xff]
    %v215 = vld [vmem:[#allocation7 + $0x3a8] sm:$0xff]
    %v216 = vld [vmem:[#allocation7 + $0x3b0] sm:$0xff]
    %v217 = vld [vmem:[#allocation7 + $0x3b8] sm:$0xff]
    %v218 = vld [vmem:[#allocation7 + $0x3c0] sm:$0xff]
    %v219 = vld [vmem:[#allocation7 + $0x3c8] sm:$0xff]
    %v220 = vld [vmem:[#allocation7 + $0x3d0] sm:$0xff]
    %v221 = vld [vmem:[#allocation7 + $0x3d8] sm:$0xff]
    %v222 = vld [vmem:[#allocation7 + $0x3e0] sm:$0xff]
    %v223 = vld [vmem:[#allocation7 + $0x3e8] sm:$0xff]
    %v224 = vld [vmem:[#allocation7 + $0x3f0] sm:$0xff]
    %v225 = vld [vmem:[#allocation7 + $0x3f8] sm:$0xff]
    %v226 = vperm.slane %v96, 0
    %v227 = vperm.slane %v96, 1
    %v228 = vsub.s32 %v94, %v226
    %v229 = vsub.s32 %v95, %v227
    %vm230 = vcmp.ge.s32.totalorder %v228, 32
    %vm231 = vcmp.ge.s32.totalorder %v229, 32
    %v232 = vsel %vm230, 1, 0
    %v233 = vsel %vm231, 1, 0
    %v234 = vmul.u32 %v232, 32
    %v235 = vmul.u32 %v233, 32
    %v236 = vsub.s32 %v228, %v234
    %v237 = vsub.s32 %v229, %v235
    %v238 = vmul.u32 %v232, 2
    %v239 = vmul.u32 %v233, 2
    %v240 = vadd.s32 %v238, %v236
    %v241 = vadd.s32 %v239, %v237
    %v242 = vcvt.s32.f32 %v240
    %v243 = vcvt.s32.f32 %v241
    %v244 = vpack.c.bf16 %v242, %v242
    %v245 = vpack.c.bf16 %v243, %v243
    %v248 = vand.u32 %v91, 4294901760
    %v249 = vand.u32 %v92, 4294901760
    %v252 = vsub.f32 %v91, %v248
    %v253 = vsub.f32 %v92, %v249
    %v256 = vand.u32 %v252, 4294901760
    %v257 = vand.u32 %v253, 4294901760
    %v260 = vsub.f32 %v252, %v256
    %v261 = vsub.f32 %v253, %v257
    %v262 = vpack.c.bf16 %v248, %v248
    %v263 = vpack.c.bf16 %v249, %v249
    %v264 = vpack.c.bf16 %v256, %v256
    %v265 = vpack.c.bf16 %v257, %v257
    %v266 = vpack.c.bf16 %v260, %v260
    %v267 = vpack.c.bf16 %v261, %v261
    %v396 = vunpack.c.l.b16 %v98
    %v397 = vunpack.c.h.b16 %v98
    %v398 = vunpack.c.l.b16 %v99
    %v399 = vunpack.c.h.b16 %v99
    %v400 = vunpack.c.l.b16 %v100
    %v401 = vunpack.c.h.b16 %v100
    %v402 = vunpack.c.l.b16 %v101
    %v403 = vunpack.c.h.b16 %v101
    %v404 = vunpack.c.l.b16 %v102
    %v405 = vunpack.c.h.b16 %v102
    %v406 = vunpack.c.l.b16 %v103
    %v407 = vunpack.c.h.b16 %v103
    %v408 = vunpack.c.l.b16 %v104
    %v409 = vunpack.c.h.b16 %v104
    %v410 = vunpack.c.l.b16 %v105
    %v411 = vunpack.c.h.b16 %v105
    %v412 = vunpack.c.l.b16 %v106
    %v413 = vunpack.c.h.b16 %v106
    %v414 = vunpack.c.l.b16 %v107
    %v415 = vunpack.c.h.b16 %v107
    %v416 = vunpack.c.l.b16 %v108
    %v417 = vunpack.c.h.b16 %v108
    %v418 = vunpack.c.l.b16 %v109
    %v419 = vunpack.c.h.b16 %v109
    %v420 = vunpack.c.l.b16 %v110
    %v421 = vunpack.c.h.b16 %v110
    %v422 = vunpack.c.l.b16 %v111
    %v423 = vunpack.c.h.b16 %v111
    %v424 = vunpack.c.l.b16 %v112
    %v425 = vunpack.c.h.b16 %v112
    %v426 = vunpack.c.l.b16 %v113
    %v427 = vunpack.c.h.b16 %v113
    %v428 = vunpack.c.l.b16 %v114
    %v429 = vunpack.c.h.b16 %v114
    %v430 = vunpack.c.l.b16 %v115
    %v431 = vunpack.c.h.b16 %v115
    %v432 = vunpack.c.l.b16 %v116
    %v433 = vunpack.c.h.b16 %v116
    %v434 = vunpack.c.l.b16 %v117
    %v435 = vunpack.c.h.b16 %v117
    %v436 = vunpack.c.l.b16 %v118
    %v437 = vunpack.c.h.b16 %v118
    %v438 = vunpack.c.l.b16 %v119
    %v439 = vunpack.c.h.b16 %v119
    %v440 = vunpack.c.l.b16 %v120
    %v441 = vunpack.c.h.b16 %v120
    %v442 = vunpack.c.l.b16 %v121
    %v443 = vunpack.c.h.b16 %v121
    %v444 = vunpack.c.l.b16 %v122
    %v445 = vunpack.c.h.b16 %v122
    %v446 = vunpack.c.l.b16 %v123
    %v447 = vunpack.c.h.b16 %v123
    %v448 = vunpack.c.l.b16 %v124
    %v449 = vunpack.c.h.b16 %v124
    %v450 = vunpack.c.l.b16 %v125
    %v451 = vunpack.c.h.b16 %v125
    %v452 = vunpack.c.l.b16 %v126
    %v453 = vunpack.c.h.b16 %v126
    %v454 = vunpack.c.l.b16 %v127
    %v455 = vunpack.c.h.b16 %v127
    %v456 = vunpack.c.l.b16 %v128
    %v457 = vunpack.c.h.b16 %v128
    %v458 = vunpack.c.l.b16 %v129
    %v459 = vunpack.c.h.b16 %v129
    %v460 = vunpack.c.l.b16 %v130
    %v461 = vunpack.c.h.b16 %v130
    %v462 = vunpack.c.l.b16 %v131
    %v463 = vunpack.c.h.b16 %v131
    %v464 = vunpack.c.l.b16 %v132
    %v465 = vunpack.c.h.b16 %v132
    %v466 = vunpack.c.l.b16 %v133
    %v467 = vunpack.c.h.b16 %v133
    %v468 = vunpack.c.l.b16 %v134
    %v469 = vunpack.c.h.b16 %v134
    %v470 = vunpack.c.l.b16 %v135
    %v471 = vunpack.c.h.b16 %v135
    %v472 = vunpack.c.l.b16 %v136
    %v473 = vunpack.c.h.b16 %v136
    %v474 = vunpack.c.l.b16 %v137
    %v475 = vunpack.c.h.b16 %v137
    %v476 = vunpack.c.l.b16 %v138
    %v477 = vunpack.c.h.b16 %v138
    %v478 = vunpack.c.l.b16 %v139
    %v479 = vunpack.c.h.b16 %v139
    %v480 = vunpack.c.l.b16 %v140
    %v481 = vunpack.c.h.b16 %v140
    %v482 = vunpack.c.l.b16 %v141
    %v483 = vunpack.c.h.b16 %v141
    %v484 = vunpack.c.l.b16 %v142
    %v485 = vunpack.c.h.b16 %v142
    %v486 = vunpack.c.l.b16 %v143
    %v487 = vunpack.c.h.b16 %v143
    %v488 = vunpack.c.l.b16 %v144
    %v489 = vunpack.c.h.b16 %v144
    %v490 = vunpack.c.l.b16 %v145
    %v491 = vunpack.c.h.b16 %v145
    %v492 = vunpack.c.l.b16 %v146
    %v493 = vunpack.c.h.b16 %v146
    %v494 = vunpack.c.l.b16 %v147
    %v495 = vunpack.c.h.b16 %v147
    %v496 = vunpack.c.l.b16 %v148
    %v497 = vunpack.c.h.b16 %v148
    %v498 = vunpack.c.l.b16 %v149
    %v499 = vunpack.c.h.b16 %v149
    %v500 = vunpack.c.l.b16 %v150
    %v501 = vunpack.c.h.b16 %v150
    %v502 = vunpack.c.l.b16 %v151
    %v503 = vunpack.c.h.b16 %v151
    %v504 = vunpack.c.l.b16 %v152
    %v505 = vunpack.c.h.b16 %v152
    %v506 = vunpack.c.l.b16 %v153
    %v507 = vunpack.c.h.b16 %v153
    %v508 = vunpack.c.l.b16 %v154
    %v509 = vunpack.c.h.b16 %v154
    %v510 = vunpack.c.l.b16 %v155
    %v511 = vunpack.c.h.b16 %v155
    %v512 = vunpack.c.l.b16 %v156
    %v513 = vunpack.c.h.b16 %v156
    %v514 = vunpack.c.l.b16 %v157
    %v515 = vunpack.c.h.b16 %v157
    %v516 = vunpack.c.l.b16 %v158
    %v517 = vunpack.c.h.b16 %v158
    %v518 = vunpack.c.l.b16 %v159
    %v519 = vunpack.c.h.b16 %v159
    %v520 = vunpack.c.l.b16 %v160
    %v521 = vunpack.c.h.b16 %v160
    %v522 = vunpack.c.l.b16 %v161
    %v523 = vunpack.c.h.b16 %v161
    %v524 = vunpack.c.l.b16 %v162
    %v525 = vunpack.c.h.b16 %v162
    %v526 = vunpack.c.l.b16 %v163
    %v527 = vunpack.c.h.b16 %v163
    %v528 = vunpack.c.l.b16 %v164
    %v529 = vunpack.c.h.b16 %v164
    %v530 = vunpack.c.l.b16 %v165
    %v531 = vunpack.c.h.b16 %v165
    %v532 = vunpack.c.l.b16 %v166
    %v533 = vunpack.c.h.b16 %v166
    %v534 = vunpack.c.l.b16 %v167
    %v535 = vunpack.c.h.b16 %v167
    %v536 = vunpack.c.l.b16 %v168
    %v537 = vunpack.c.h.b16 %v168
    %v538 = vunpack.c.l.b16 %v169
    %v539 = vunpack.c.h.b16 %v169
    %v540 = vunpack.c.l.b16 %v170
    %v541 = vunpack.c.h.b16 %v170
    %v542 = vunpack.c.l.b16 %v171
    %v543 = vunpack.c.h.b16 %v171
    %v544 = vunpack.c.l.b16 %v172
    %v545 = vunpack.c.h.b16 %v172
    %v546 = vunpack.c.l.b16 %v173
    %v547 = vunpack.c.h.b16 %v173
    %v548 = vunpack.c.l.b16 %v174
    %v549 = vunpack.c.h.b16 %v174
    %v550 = vunpack.c.l.b16 %v175
    %v551 = vunpack.c.h.b16 %v175
    %v552 = vunpack.c.l.b16 %v176
    %v553 = vunpack.c.h.b16 %v176
    %v554 = vunpack.c.l.b16 %v177
    %v555 = vunpack.c.h.b16 %v177
    %v556 = vunpack.c.l.b16 %v178
    %v557 = vunpack.c.h.b16 %v178
    %v558 = vunpack.c.l.b16 %v179
    %v559 = vunpack.c.h.b16 %v179
    %v560 = vunpack.c.l.b16 %v180
    %v561 = vunpack.c.h.b16 %v180
    %v562 = vunpack.c.l.b16 %v181
    %v563 = vunpack.c.h.b16 %v181
    %v564 = vunpack.c.l.b16 %v182
    %v565 = vunpack.c.h.b16 %v182
    %v566 = vunpack.c.l.b16 %v183
    %v567 = vunpack.c.h.b16 %v183
    %v568 = vunpack.c.l.b16 %v184
    %v569 = vunpack.c.h.b16 %v184
    %v570 = vunpack.c.l.b16 %v185
    %v571 = vunpack.c.h.b16 %v185
    %v572 = vunpack.c.l.b16 %v186
    %v573 = vunpack.c.h.b16 %v186
    %v574 = vunpack.c.l.b16 %v187
    %v575 = vunpack.c.h.b16 %v187
    %v576 = vunpack.c.l.b16 %v188
    %v577 = vunpack.c.h.b16 %v188
    %v578 = vunpack.c.l.b16 %v189
    %v579 = vunpack.c.h.b16 %v189
    %v580 = vunpack.c.l.b16 %v190
    %v581 = vunpack.c.h.b16 %v190
    %v582 = vunpack.c.l.b16 %v191
    %v583 = vunpack.c.h.b16 %v191
    %v584 = vunpack.c.l.b16 %v192
    %v585 = vunpack.c.h.b16 %v192
    %v586 = vunpack.c.l.b16 %v193
    %v587 = vunpack.c.h.b16 %v193
    %v588 = vunpack.c.l.b16 %v194
    %v589 = vunpack.c.h.b16 %v194
    %v590 = vunpack.c.l.b16 %v195
    %v591 = vunpack.c.h.b16 %v195
    %v592 = vunpack.c.l.b16 %v196
    %v593 = vunpack.c.h.b16 %v196
    %v594 = vunpack.c.l.b16 %v197
    %v595 = vunpack.c.h.b16 %v197
    %v596 = vunpack.c.l.b16 %v198
    %v597 = vunpack.c.h.b16 %v198
    %v598 = vunpack.c.l.b16 %v199
    %v599 = vunpack.c.h.b16 %v199
    %v600 = vunpack.c.l.b16 %v200
    %v601 = vunpack.c.h.b16 %v200
    %v602 = vunpack.c.l.b16 %v201
    %v603 = vunpack.c.h.b16 %v201
    %v604 = vunpack.c.l.b16 %v202
    %v605 = vunpack.c.h.b16 %v202
    %v606 = vunpack.c.l.b16 %v203
    %v607 = vunpack.c.h.b16 %v203
    %v608 = vunpack.c.l.b16 %v204
    %v609 = vunpack.c.h.b16 %v204
    %v610 = vunpack.c.l.b16 %v205
    %v611 = vunpack.c.h.b16 %v205
    %v612 = vunpack.c.l.b16 %v206
    %v613 = vunpack.c.h.b16 %v206
    %v614 = vunpack.c.l.b16 %v207
    %v615 = vunpack.c.h.b16 %v207
    %v616 = vunpack.c.l.b16 %v208
    %v617 = vunpack.c.h.b16 %v208
    %v618 = vunpack.c.l.b16 %v209
    %v619 = vunpack.c.h.b16 %v209
    %v620 = vunpack.c.l.b16 %v210
    %v621 = vunpack.c.h.b16 %v210
    %v622 = vunpack.c.l.b16 %v211
    %v623 = vunpack.c.h.b16 %v211
    %v624 = vunpack.c.l.b16 %v212
    %v625 = vunpack.c.h.b16 %v212
    %v626 = vunpack.c.l.b16 %v213
    %v627 = vunpack.c.h.b16 %v213
    %v628 = vunpack.c.l.b16 %v214
    %v629 = vunpack.c.h.b16 %v214
    %v630 = vunpack.c.l.b16 %v215
    %v631 = vunpack.c.h.b16 %v215
    %v632 = vunpack.c.l.b16 %v216
    %v633 = vunpack.c.h.b16 %v216
    %v634 = vunpack.c.l.b16 %v217
    %v635 = vunpack.c.h.b16 %v217
    %v636 = vunpack.c.l.b16 %v218
    %v637 = vunpack.c.h.b16 %v218
    %v638 = vunpack.c.l.b16 %v219
    %v639 = vunpack.c.h.b16 %v219
    %v640 = vunpack.c.l.b16 %v220
    %v641 = vunpack.c.h.b16 %v220
    %v642 = vunpack.c.l.b16 %v221
    %v643 = vunpack.c.h.b16 %v221
    %v644 = vunpack.c.l.b16 %v222
    %v645 = vunpack.c.h.b16 %v222
    %v646 = vunpack.c.l.b16 %v223
    %v647 = vunpack.c.h.b16 %v223
    %v648 = vunpack.c.l.b16 %v224
    %v649 = vunpack.c.h.b16 %v224
    %v650 = vunpack.c.l.b16 %v225
    %v651 = vunpack.c.h.b16 %v225
    %v652 = vpack.c.b16 %v404, %v396
    %v653 = vpack.c.b16 %v405, %v397
    %v654 = vpack.c.b16 %v406, %v398
    %v655 = vpack.c.b16 %v407, %v399
    %v656 = vpack.c.b16 %v408, %v400
    %v657 = vpack.c.b16 %v409, %v401
    %v658 = vpack.c.b16 %v410, %v402
    %v659 = vpack.c.b16 %v411, %v403
    %v660 = vpack.c.b16 %v420, %v412
    %v661 = vpack.c.b16 %v421, %v413
    %v662 = vpack.c.b16 %v422, %v414
    %v663 = vpack.c.b16 %v423, %v415
    %v664 = vpack.c.b16 %v424, %v416
    %v665 = vpack.c.b16 %v425, %v417
    %v666 = vpack.c.b16 %v426, %v418
    %v667 = vpack.c.b16 %v427, %v419
    %v668 = vpack.c.b16 %v436, %v428
    %v669 = vpack.c.b16 %v437, %v429
    %v670 = vpack.c.b16 %v438, %v430
    %v671 = vpack.c.b16 %v439, %v431
    %v672 = vpack.c.b16 %v440, %v432
    %v673 = vpack.c.b16 %v441, %v433
    %v674 = vpack.c.b16 %v442, %v434
    %v675 = vpack.c.b16 %v443, %v435
    %v676 = vpack.c.b16 %v452, %v444
    %v677 = vpack.c.b16 %v453, %v445
    %v678 = vpack.c.b16 %v454, %v446
    %v679 = vpack.c.b16 %v455, %v447
    %v680 = vpack.c.b16 %v456, %v448
    %v681 = vpack.c.b16 %v457, %v449
    %v682 = vpack.c.b16 %v458, %v450
    %v683 = vpack.c.b16 %v459, %v451
    %v684 = vpack.c.b16 %v468, %v460
    %v685 = vpack.c.b16 %v469, %v461
    %v686 = vpack.c.b16 %v470, %v462
    %v687 = vpack.c.b16 %v471, %v463
    %v688 = vpack.c.b16 %v472, %v464
    %v689 = vpack.c.b16 %v473, %v465
    %v690 = vpack.c.b16 %v474, %v466
    %v691 = vpack.c.b16 %v475, %v467
    %v692 = vpack.c.b16 %v484, %v476
    %v693 = vpack.c.b16 %v485, %v477
    %v694 = vpack.c.b16 %v486, %v478
    %v695 = vpack.c.b16 %v487, %v479
    %v696 = vpack.c.b16 %v488, %v480
    %v697 = vpack.c.b16 %v489, %v481
    %v698 = vpack.c.b16 %v490, %v482
    %v699 = vpack.c.b16 %v491, %v483
    %v700 = vpack.c.b16 %v500, %v492
    %v701 = vpack.c.b16 %v501, %v493
    %v702 = vpack.c.b16 %v502, %v494
    %v703 = vpack.c.b16 %v503, %v495
    %v704 = vpack.c.b16 %v504, %v496
    %v705 = vpack.c.b16 %v505, %v497
    %v706 = vpack.c.b16 %v506, %v498
    %v707 = vpack.c.b16 %v507, %v499
    %v708 = vpack.c.b16 %v516, %v508
    %v709 = vpack.c.b16 %v517, %v509
    %v710 = vpack.c.b16 %v518, %v510
    %v711 = vpack.c.b16 %v519, %v511
    %v712 = vpack.c.b16 %v520, %v512
    %v713 = vpack.c.b16 %v521, %v513
    %v714 = vpack.c.b16 %v522, %v514
    %v715 = vpack.c.b16 %v523, %v515
    %v716 = vpack.c.b16 %v532, %v524
    %v717 = vpack.c.b16 %v533, %v525
    %v718 = vpack.c.b16 %v534, %v526
    %v719 = vpack.c.b16 %v535, %v527
    %v720 = vpack.c.b16 %v536, %v528
    %v721 = vpack.c.b16 %v537, %v529
    %v722 = vpack.c.b16 %v538, %v530
    %v723 = vpack.c.b16 %v539, %v531
    %v724 = vpack.c.b16 %v548, %v540
    %v725 = vpack.c.b16 %v549, %v541
    %v726 = vpack.c.b16 %v550, %v542
    %v727 = vpack.c.b16 %v551, %v543
    %v728 = vpack.c.b16 %v552, %v544
    %v729 = vpack.c.b16 %v553, %v545
    %v730 = vpack.c.b16 %v554, %v546
    %v731 = vpack.c.b16 %v555, %v547
    %v732 = vpack.c.b16 %v564, %v556
    %v733 = vpack.c.b16 %v565, %v557
    %v734 = vpack.c.b16 %v566, %v558
    %v735 = vpack.c.b16 %v567, %v559
    %v736 = vpack.c.b16 %v568, %v560
    %v737 = vpack.c.b16 %v569, %v561
    %v738 = vpack.c.b16 %v570, %v562
    %v739 = vpack.c.b16 %v571, %v563
    %v740 = vpack.c.b16 %v580, %v572
    %v741 = vpack.c.b16 %v581, %v573
    %v742 = vpack.c.b16 %v582, %v574
    %v743 = vpack.c.b16 %v583, %v575
    %v744 = vpack.c.b16 %v584, %v576
    %v745 = vpack.c.b16 %v585, %v577
    %v746 = vpack.c.b16 %v586, %v578
    %v747 = vpack.c.b16 %v587, %v579
    %v748 = vpack.c.b16 %v596, %v588
    %v749 = vpack.c.b16 %v597, %v589
    %v750 = vpack.c.b16 %v598, %v590
    %v751 = vpack.c.b16 %v599, %v591
    %v752 = vpack.c.b16 %v600, %v592
    %v753 = vpack.c.b16 %v601, %v593
    %v754 = vpack.c.b16 %v602, %v594
    %v755 = vpack.c.b16 %v603, %v595
    %v756 = vpack.c.b16 %v612, %v604
    %v757 = vpack.c.b16 %v613, %v605
    %v758 = vpack.c.b16 %v614, %v606
    %v759 = vpack.c.b16 %v615, %v607
    %v760 = vpack.c.b16 %v616, %v608
    %v761 = vpack.c.b16 %v617, %v609
    %v762 = vpack.c.b16 %v618, %v610
    %v763 = vpack.c.b16 %v619, %v611
    %v764 = vpack.c.b16 %v628, %v620
    %v765 = vpack.c.b16 %v629, %v621
    %v766 = vpack.c.b16 %v630, %v622
    %v767 = vpack.c.b16 %v631, %v623
    %v768 = vpack.c.b16 %v632, %v624
    %v769 = vpack.c.b16 %v633, %v625
    %v770 = vpack.c.b16 %v634, %v626
    %v771 = vpack.c.b16 %v635, %v627
    %v772 = vpack.c.b16 %v644, %v636
    %v773 = vpack.c.b16 %v645, %v637
    %v774 = vpack.c.b16 %v646, %v638
    %v775 = vpack.c.b16 %v647, %v639
    %v776 = vpack.c.b16 %v648, %v640
    %v777 = vpack.c.b16 %v649, %v641
    %v778 = vpack.c.b16 %v650, %v642
    %v779 = vpack.c.b16 %v651, %v643
    %908 = vmatpush.bf16.msra.mxu0 %v708
    %909 = vmatpush.bf16.msra.mxu0 %v700
    %910 = vmatpush.bf16.msra.mxu0 %v692
    %911 = vmatpush.bf16.msra.mxu0 %v684
    %912 = vmatpush.bf16.msra.mxu0 %v676
    %913 = vmatpush.bf16.msra.mxu0 %v668
    %914 = vmatpush.bf16.msra.mxu0 %v660
    %915 = vmatpush.bf16.msra.mxu0 %v652
    %916 = vmatmul.bf16.gmra.mxu0 %v264
    %v917 = vpop.f32.mrf.mxu0
    %v918 = vadd.f32 0.0, %v917
    %v919 = vpop.f32.mrf.mxu0
    %920 = vdwg.mxu0
    %921 = vmatpush.bf16.msra.mxu0 %v772
    %922 = vmatpush.bf16.msra.mxu0 %v764
    %923 = vmatpush.bf16.msra.mxu0 %v756
    %924 = vmatpush.bf16.msra.mxu0 %v748
    %925 = vmatpush.bf16.msra.mxu0 %v740
    %926 = vmatpush.bf16.msra.mxu0 %v732
    %927 = vmatpush.bf16.msra.mxu0 %v724
    %928 = vmatpush.bf16.msra.mxu0 %v716
    %929 = vmatmul.bf16.gmra.mxu0 %v265
    %v930 = vpop.f32.mrf.mxu0
    %v931 = vadd.f32 %v918, %v930
    %v932 = vpop.f32.mrf.mxu0
    %933 = vdwg.mxu0
    %934 = vmatpush.bf16.msra.mxu0 %v709
    %935 = vmatpush.bf16.msra.mxu0 %v701
    %936 = vmatpush.bf16.msra.mxu0 %v693
    %937 = vmatpush.bf16.msra.mxu0 %v685
    %938 = vmatpush.bf16.msra.mxu0 %v677
    %939 = vmatpush.bf16.msra.mxu0 %v669
    %940 = vmatpush.bf16.msra.mxu0 %v661
    %941 = vmatpush.bf16.msra.mxu0 %v653
    %942 = vmatmul.bf16.gmra.mxu0 %v264
    %v943 = vpop.f32.mrf.mxu0
    %v944 = vadd.f32 0.0, %v943
    %v945 = vpop.f32.mrf.mxu0
    %946 = vdwg.mxu0
    %947 = vmatpush.bf16.msra.mxu0 %v773
    %948 = vmatpush.bf16.msra.mxu0 %v765
    %949 = vmatpush.bf16.msra.mxu0 %v757
    %950 = vmatpush.bf16.msra.mxu0 %v749
    %951 = vmatpush.bf16.msra.mxu0 %v741
    %952 = vmatpush.bf16.msra.mxu0 %v733
    %953 = vmatpush.bf16.msra.mxu0 %v725
    %954 = vmatpush.bf16.msra.mxu0 %v717
    %955 = vmatmul.bf16.gmra.mxu0 %v265
    %v956 = vpop.f32.mrf.mxu0
    %v957 = vadd.f32 %v944, %v956
    %v958 = vpop.f32.mrf.mxu0
    %959 = vdwg.mxu0
    %960 = vmatpush.bf16.msra.mxu0 %v710
    %961 = vmatpush.bf16.msra.mxu0 %v702
    %962 = vmatpush.bf16.msra.mxu0 %v694
    %963 = vmatpush.bf16.msra.mxu0 %v686
    %964 = vmatpush.bf16.msra.mxu0 %v678
    %965 = vmatpush.bf16.msra.mxu0 %v670
    %966 = vmatpush.bf16.msra.mxu0 %v662
    %967 = vmatpush.bf16.msra.mxu0 %v654
    %968 = vmatmul.bf16.gmra.mxu0 %v264
    %v969 = vpop.f32.mrf.mxu0
    %v970 = vadd.f32 0.0, %v969
    %v971 = vpop.f32.mrf.mxu0
    %972 = vdwg.mxu0
    %973 = vmatpush.bf16.msra.mxu0 %v774
    %974 = vmatpush.bf16.msra.mxu0 %v766
    %975 = vmatpush.bf16.msra.mxu0 %v758
    %976 = vmatpush.bf16.msra.mxu0 %v750
    %977 = vmatpush.bf16.msra.mxu0 %v742
    %978 = vmatpush.bf16.msra.mxu0 %v734
    %979 = vmatpush.bf16.msra.mxu0 %v726
    %980 = vmatpush.bf16.msra.mxu0 %v718
    %981 = vmatmul.bf16.gmra.mxu0 %v265
    %v982 = vpop.f32.mrf.mxu0
    %v983 = vadd.f32 %v970, %v982
    %v984 = vpop.f32.mrf.mxu0
    %985 = vdwg.mxu0
    %986 = vmatpush.bf16.msra.mxu0 %v711
    %987 = vmatpush.bf16.msra.mxu0 %v703
    %988 = vmatpush.bf16.msra.mxu0 %v695
    %989 = vmatpush.bf16.msra.mxu0 %v687
    %990 = vmatpush.bf16.msra.mxu0 %v679
    %991 = vmatpush.bf16.msra.mxu0 %v671
    %992 = vmatpush.bf16.msra.mxu0 %v663
    %993 = vmatpush.bf16.msra.mxu0 %v655
    %994 = vmatmul.bf16.gmra.mxu0 %v264
    %v995 = vpop.f32.mrf.mxu0
    %v996 = vadd.f32 0.0, %v995
    %v997 = vpop.f32.mrf.mxu0
    %998 = vdwg.mxu0
    %999 = vmatpush.bf16.msra.mxu0 %v775
    %1000 = vmatpush.bf16.msra.mxu0 %v767
    %1001 = vmatpush.bf16.msra.mxu0 %v759
    %1002 = vmatpush.bf16.msra.mxu0 %v751
    %1003 = vmatpush.bf16.msra.mxu0 %v743
    %1004 = vmatpush.bf16.msra.mxu0 %v735
    %1005 = vmatpush.bf16.msra.mxu0 %v727
    %1006 = vmatpush.bf16.msra.mxu0 %v719
    %1007 = vmatmul.bf16.gmra.mxu0 %v265
    %v1008 = vpop.f32.mrf.mxu0
    %v1009 = vadd.f32 %v996, %v1008
    %v1010 = vpop.f32.mrf.mxu0
    %1011 = vdwg.mxu0
    %1012 = vmatpush.bf16.msra.mxu0 %v712
    %1013 = vmatpush.bf16.msra.mxu0 %v704
    %1014 = vmatpush.bf16.msra.mxu0 %v696
    %1015 = vmatpush.bf16.msra.mxu0 %v688
    %1016 = vmatpush.bf16.msra.mxu0 %v680
    %1017 = vmatpush.bf16.msra.mxu0 %v672
    %1018 = vmatpush.bf16.msra.mxu0 %v664
    %1019 = vmatpush.bf16.msra.mxu0 %v656
    %1020 = vmatmul.bf16.gmra.mxu0 %v264
    %v1021 = vpop.f32.mrf.mxu0
    %v1022 = vadd.f32 0.0, %v1021
    %v1023 = vpop.f32.mrf.mxu0
    %1024 = vdwg.mxu0
    %1025 = vmatpush.bf16.msra.mxu0 %v776
    %1026 = vmatpush.bf16.msra.mxu0 %v768
    %1027 = vmatpush.bf16.msra.mxu0 %v760
    %1028 = vmatpush.bf16.msra.mxu0 %v752
    %1029 = vmatpush.bf16.msra.mxu0 %v744
    %1030 = vmatpush.bf16.msra.mxu0 %v736
    %1031 = vmatpush.bf16.msra.mxu0 %v728
    %1032 = vmatpush.bf16.msra.mxu0 %v720
    %1033 = vmatmul.bf16.gmra.mxu0 %v265
    %v1034 = vpop.f32.mrf.mxu0
    %v1035 = vadd.f32 %v1022, %v1034
    %v1036 = vpop.f32.mrf.mxu0
    %1037 = vdwg.mxu0
    %1038 = vmatpush.bf16.msra.mxu0 %v713
    %1039 = vmatpush.bf16.msra.mxu0 %v705
    %1040 = vmatpush.bf16.msra.mxu0 %v697
    %1041 = vmatpush.bf16.msra.mxu0 %v689
    %1042 = vmatpush.bf16.msra.mxu0 %v681
    %1043 = vmatpush.bf16.msra.mxu0 %v673
    %1044 = vmatpush.bf16.msra.mxu0 %v665
    %1045 = vmatpush.bf16.msra.mxu0 %v657
    %1046 = vmatmul.bf16.gmra.mxu0 %v264
    %v1047 = vpop.f32.mrf.mxu0
    %v1048 = vadd.f32 0.0, %v1047
    %v1049 = vpop.f32.mrf.mxu0
    %1050 = vdwg.mxu0
    %1051 = vmatpush.bf16.msra.mxu0 %v777
    %1052 = vmatpush.bf16.msra.mxu0 %v769
    %1053 = vmatpush.bf16.msra.mxu0 %v761
    %1054 = vmatpush.bf16.msra.mxu0 %v753
    %1055 = vmatpush.bf16.msra.mxu0 %v745
    %1056 = vmatpush.bf16.msra.mxu0 %v737
    %1057 = vmatpush.bf16.msra.mxu0 %v729
    %1058 = vmatpush.bf16.msra.mxu0 %v721
    %1059 = vmatmul.bf16.gmra.mxu0 %v265
    %v1060 = vpop.f32.mrf.mxu0
    %v1061 = vadd.f32 %v1048, %v1060
    %v1062 = vpop.f32.mrf.mxu0
    %1063 = vdwg.mxu0
    %1064 = vmatpush.bf16.msra.mxu0 %v714
    %1065 = vmatpush.bf16.msra.mxu0 %v706
    %1066 = vmatpush.bf16.msra.mxu0 %v698
    %1067 = vmatpush.bf16.msra.mxu0 %v690
    %1068 = vmatpush.bf16.msra.mxu0 %v682
    %1069 = vmatpush.bf16.msra.mxu0 %v674
    %1070 = vmatpush.bf16.msra.mxu0 %v666
    %1071 = vmatpush.bf16.msra.mxu0 %v658
    %1072 = vmatmul.bf16.gmra.mxu0 %v264
    %v1073 = vpop.f32.mrf.mxu0
    %v1074 = vadd.f32 0.0, %v1073
    %v1075 = vpop.f32.mrf.mxu0
    %1076 = vdwg.mxu0
    %1077 = vmatpush.bf16.msra.mxu0 %v778
    %1078 = vmatpush.bf16.msra.mxu0 %v770
    %1079 = vmatpush.bf16.msra.mxu0 %v762
    %1080 = vmatpush.bf16.msra.mxu0 %v754
    %1081 = vmatpush.bf16.msra.mxu0 %v746
    %1082 = vmatpush.bf16.msra.mxu0 %v738
    %1083 = vmatpush.bf16.msra.mxu0 %v730
    %1084 = vmatpush.bf16.msra.mxu0 %v722
    %1085 = vmatmul.bf16.gmra.mxu0 %v265
    %v1086 = vpop.f32.mrf.mxu0
    %v1087 = vadd.f32 %v1074, %v1086
    %v1088 = vpop.f32.mrf.mxu0
    %1089 = vdwg.mxu0
    %1090 = vmatpush.bf16.msra.mxu0 %v715
    %1091 = vmatpush.bf16.msra.mxu0 %v707
    %1092 = vmatpush.bf16.msra.mxu0 %v699
    %1093 = vmatpush.bf16.msra.mxu0 %v691
    %1094 = vmatpush.bf16.msra.mxu0 %v683
    %1095 = vmatpush.bf16.msra.mxu0 %v675
    %1096 = vmatpush.bf16.msra.mxu0 %v667
    %1097 = vmatpush.bf16.msra.mxu0 %v659
    %1098 = vmatmul.bf16.gmra.mxu0 %v264
    %v1099 = vpop.f32.mrf.mxu0
    %v1100 = vadd.f32 0.0, %v1099
    %v1101 = vpop.f32.mrf.mxu0
    %1102 = vdwg.mxu0
    %1103 = vmatpush.bf16.msra.mxu0 %v779
    %1104 = vmatpush.bf16.msra.mxu0 %v771
    %1105 = vmatpush.bf16.msra.mxu0 %v763
    %1106 = vmatpush.bf16.msra.mxu0 %v755
    %1107 = vmatpush.bf16.msra.mxu0 %v747
    %1108 = vmatpush.bf16.msra.mxu0 %v739
    %1109 = vmatpush.bf16.msra.mxu0 %v731
    %1110 = vmatpush.bf16.msra.mxu0 %v723
    %1111 = vmatmul.bf16.gmra.mxu0 %v265
    %v1112 = vpop.f32.mrf.mxu0
    %v1113 = vadd.f32 %v1100, %v1112
    %v1114 = vpop.f32.mrf.mxu0
    %1115 = vdwg.mxu0
    %1116 = vmatpush.bf16.msra.mxu0 %v708
    %1117 = vmatpush.bf16.msra.mxu0 %v700
    %1118 = vmatpush.bf16.msra.mxu0 %v692
    %1119 = vmatpush.bf16.msra.mxu0 %v684
    %1120 = vmatpush.bf16.msra.mxu0 %v676
    %1121 = vmatpush.bf16.msra.mxu0 %v668
    %1122 = vmatpush.bf16.msra.mxu0 %v660
    %1123 = vmatpush.bf16.msra.mxu0 %v652
    %1124 = vmatmul.bf16.gmra.mxu0 %v262
    %v1125 = vpop.f32.mrf.mxu0
    %v1126 = vadd.f32 %v931, %v1125
    %v1127 = vpop.f32.mrf.mxu0
    %1128 = vdwg.mxu0
    %1129 = vmatpush.bf16.msra.mxu0 %v772
    %1130 = vmatpush.bf16.msra.mxu0 %v764
    %1131 = vmatpush.bf16.msra.mxu0 %v756
    %1132 = vmatpush.bf16.msra.mxu0 %v748
    %1133 = vmatpush.bf16.msra.mxu0 %v740
    %1134 = vmatpush.bf16.msra.mxu0 %v732
    %1135 = vmatpush.bf16.msra.mxu0 %v724
    %1136 = vmatpush.bf16.msra.mxu0 %v716
    %1137 = vmatmul.bf16.gmra.mxu0 %v263
    %v1138 = vpop.f32.mrf.mxu0
    %v1139 = vadd.f32 %v1126, %v1138
    %v1140 = vpop.f32.mrf.mxu0
    %1141 = vdwg.mxu0
    %1142 = vmatpush.bf16.msra.mxu0 %v709
    %1143 = vmatpush.bf16.msra.mxu0 %v701
    %1144 = vmatpush.bf16.msra.mxu0 %v693
    %1145 = vmatpush.bf16.msra.mxu0 %v685
    %1146 = vmatpush.bf16.msra.mxu0 %v677
    %1147 = vmatpush.bf16.msra.mxu0 %v669
    %1148 = vmatpush.bf16.msra.mxu0 %v661
    %1149 = vmatpush.bf16.msra.mxu0 %v653
    %1150 = vmatmul.bf16.gmra.mxu0 %v262
    %v1151 = vpop.f32.mrf.mxu0
    %v1152 = vadd.f32 %v957, %v1151
    %v1153 = vpop.f32.mrf.mxu0
    %1154 = vdwg.mxu0
    %1155 = vmatpush.bf16.msra.mxu0 %v773
    %1156 = vmatpush.bf16.msra.mxu0 %v765
    %1157 = vmatpush.bf16.msra.mxu0 %v757
    %1158 = vmatpush.bf16.msra.mxu0 %v749
    %1159 = vmatpush.bf16.msra.mxu0 %v741
    %1160 = vmatpush.bf16.msra.mxu0 %v733
    %1161 = vmatpush.bf16.msra.mxu0 %v725
    %1162 = vmatpush.bf16.msra.mxu0 %v717
    %1163 = vmatmul.bf16.gmra.mxu0 %v263
    %v1164 = vpop.f32.mrf.mxu0
    %v1165 = vadd.f32 %v1152, %v1164
    %v1166 = vpop.f32.mrf.mxu0
    %1167 = vdwg.mxu0
    %1168 = vmatpush.bf16.msra.mxu0 %v710
    %1169 = vmatpush.bf16.msra.mxu0 %v702
    %1170 = vmatpush.bf16.msra.mxu0 %v694
    %1171 = vmatpush.bf16.msra.mxu0 %v686
    %1172 = vmatpush.bf16.msra.mxu0 %v678
    %1173 = vmatpush.bf16.msra.mxu0 %v670
    %1174 = vmatpush.bf16.msra.mxu0 %v662
    %1175 = vmatpush.bf16.msra.mxu0 %v654
    %1176 = vmatmul.bf16.gmra.mxu0 %v262
    %v1177 = vpop.f32.mrf.mxu0
    %v1178 = vadd.f32 %v983, %v1177
    %v1179 = vpop.f32.mrf.mxu0
    %1180 = vdwg.mxu0
    %1181 = vmatpush.bf16.msra.mxu0 %v774
    %1182 = vmatpush.bf16.msra.mxu0 %v766
    %1183 = vmatpush.bf16.msra.mxu0 %v758
    %1184 = vmatpush.bf16.msra.mxu0 %v750
    %1185 = vmatpush.bf16.msra.mxu0 %v742
    %1186 = vmatpush.bf16.msra.mxu0 %v734
    %1187 = vmatpush.bf16.msra.mxu0 %v726
    %1188 = vmatpush.bf16.msra.mxu0 %v718
    %1189 = vmatmul.bf16.gmra.mxu0 %v263
    %v1190 = vpop.f32.mrf.mxu0
    %v1191 = vadd.f32 %v1178, %v1190
    %v1192 = vpop.f32.mrf.mxu0
    %1193 = vdwg.mxu0
    %1194 = vmatpush.bf16.msra.mxu0 %v711
    %1195 = vmatpush.bf16.msra.mxu0 %v703
    %1196 = vmatpush.bf16.msra.mxu0 %v695
    %1197 = vmatpush.bf16.msra.mxu0 %v687
    %1198 = vmatpush.bf16.msra.mxu0 %v679
    %1199 = vmatpush.bf16.msra.mxu0 %v671
    %1200 = vmatpush.bf16.msra.mxu0 %v663
    %1201 = vmatpush.bf16.msra.mxu0 %v655
    %1202 = vmatmul.bf16.gmra.mxu0 %v262
    %v1203 = vpop.f32.mrf.mxu0
    %v1204 = vadd.f32 %v1009, %v1203
    %v1205 = vpop.f32.mrf.mxu0
    %1206 = vdwg.mxu0
    %1207 = vmatpush.bf16.msra.mxu0 %v775
    %1208 = vmatpush.bf16.msra.mxu0 %v767
    %1209 = vmatpush.bf16.msra.mxu0 %v759
    %1210 = vmatpush.bf16.msra.mxu0 %v751
    %1211 = vmatpush.bf16.msra.mxu0 %v743
    %1212 = vmatpush.bf16.msra.mxu0 %v735
    %1213 = vmatpush.bf16.msra.mxu0 %v727
    %1214 = vmatpush.bf16.msra.mxu0 %v719
    %1215 = vmatmul.bf16.gmra.mxu0 %v263
    %v1216 = vpop.f32.mrf.mxu0
    %v1217 = vadd.f32 %v1204, %v1216
    %v1218 = vpop.f32.mrf.mxu0
    %1219 = vdwg.mxu0
    %1220 = vmatpush.bf16.msra.mxu0 %v712
    %1221 = vmatpush.bf16.msra.mxu0 %v704
    %1222 = vmatpush.bf16.msra.mxu0 %v696
    %1223 = vmatpush.bf16.msra.mxu0 %v688
    %1224 = vmatpush.bf16.msra.mxu0 %v680
    %1225 = vmatpush.bf16.msra.mxu0 %v672
    %1226 = vmatpush.bf16.msra.mxu0 %v664
    %1227 = vmatpush.bf16.msra.mxu0 %v656
    %1228 = vmatmul.bf16.gmra.mxu0 %v262
    %v1229 = vpop.f32.mrf.mxu0
    %v1230 = vadd.f32 %v1035, %v1229
    %v1231 = vpop.f32.mrf.mxu0
    %1232 = vdwg.mxu0
    %1233 = vmatpush.bf16.msra.mxu0 %v776
    %1234 = vmatpush.bf16.msra.mxu0 %v768
    %1235 = vmatpush.bf16.msra.mxu0 %v760
    %1236 = vmatpush.bf16.msra.mxu0 %v752
    %1237 = vmatpush.bf16.msra.mxu0 %v744
    %1238 = vmatpush.bf16.msra.mxu0 %v736
    %1239 = vmatpush.bf16.msra.mxu0 %v728
    %1240 = vmatpush.bf16.msra.mxu0 %v720
    %1241 = vmatmul.bf16.gmra.mxu0 %v263
    %v1242 = vpop.f32.mrf.mxu0
    %v1243 = vadd.f32 %v1230, %v1242
    %v1244 = vpop.f32.mrf.mxu0
    %1245 = vdwg.mxu0
    %1246 = vmatpush.bf16.msra.mxu0 %v713
    %1247 = vmatpush.bf16.msra.mxu0 %v705
    %1248 = vmatpush.bf16.msra.mxu0 %v697
    %1249 = vmatpush.bf16.msra.mxu0 %v689
    %1250 = vmatpush.bf16.msra.mxu0 %v681
    %1251 = vmatpush.bf16.msra.mxu0 %v673
    %1252 = vmatpush.bf16.msra.mxu0 %v665
    %1253 = vmatpush.bf16.msra.mxu0 %v657
    %1254 = vmatmul.bf16.gmra.mxu0 %v262
    %v1255 = vpop.f32.mrf.mxu0
    %v1256 = vadd.f32 %v1061, %v1255
    %v1257 = vpop.f32.mrf.mxu0
    %1258 = vdwg.mxu0
    %1259 = vmatpush.bf16.msra.mxu0 %v777
    %1260 = vmatpush.bf16.msra.mxu0 %v769
    %1261 = vmatpush.bf16.msra.mxu0 %v761
    %1262 = vmatpush.bf16.msra.mxu0 %v753
    %1263 = vmatpush.bf16.msra.mxu0 %v745
    %1264 = vmatpush.bf16.msra.mxu0 %v737
    %1265 = vmatpush.bf16.msra.mxu0 %v729
    %1266 = vmatpush.bf16.msra.mxu0 %v721
    %1267 = vmatmul.bf16.gmra.mxu0 %v263
    %v1268 = vpop.f32.mrf.mxu0
    %v1269 = vadd.f32 %v1256, %v1268
    %v1270 = vpop.f32.mrf.mxu0
    %1271 = vdwg.mxu0
    %1272 = vmatpush.bf16.msra.mxu0 %v714
    %1273 = vmatpush.bf16.msra.mxu0 %v706
    %1274 = vmatpush.bf16.msra.mxu0 %v698
    %1275 = vmatpush.bf16.msra.mxu0 %v690
    %1276 = vmatpush.bf16.msra.mxu0 %v682
    %1277 = vmatpush.bf16.msra.mxu0 %v674
    %1278 = vmatpush.bf16.msra.mxu0 %v666
    %1279 = vmatpush.bf16.msra.mxu0 %v658
    %1280 = vmatmul.bf16.gmra.mxu0 %v262
    %v1281 = vpop.f32.mrf.mxu0
    %v1282 = vadd.f32 %v1087, %v1281
    %v1283 = vpop.f32.mrf.mxu0
    %1284 = vdwg.mxu0
    %1285 = vmatpush.bf16.msra.mxu0 %v778
    %1286 = vmatpush.bf16.msra.mxu0 %v770
    %1287 = vmatpush.bf16.msra.mxu0 %v762
    %1288 = vmatpush.bf16.msra.mxu0 %v754
    %1289 = vmatpush.bf16.msra.mxu0 %v746
    %1290 = vmatpush.bf16.msra.mxu0 %v738
    %1291 = vmatpush.bf16.msra.mxu0 %v730
    %1292 = vmatpush.bf16.msra.mxu0 %v722
    %1293 = vmatmul.bf16.gmra.mxu0 %v263
    %v1294 = vpop.f32.mrf.mxu0
    %v1295 = vadd.f32 %v1282, %v1294
    %v1296 = vpop.f32.mrf.mxu0
    %1297 = vdwg.mxu0
    %1298 = vmatpush.bf16.msra.mxu0 %v715
    %1299 = vmatpush.bf16.msra.mxu0 %v707
    %1300 = vmatpush.bf16.msra.mxu0 %v699
    %1301 = vmatpush.bf16.msra.mxu0 %v691
    %1302 = vmatpush.bf16.msra.mxu0 %v683
    %1303 = vmatpush.bf16.msra.mxu0 %v675
    %1304 = vmatpush.bf16.msra.mxu0 %v667
    %1305 = vmatpush.bf16.msra.mxu0 %v659
    %1306 = vmatmul.bf16.gmra.mxu0 %v262
    %v1307 = vpop.f32.mrf.mxu0
    %v1308 = vadd.f32 %v1113, %v1307
    %v1309 = vpop.f32.mrf.mxu0
    %1310 = vdwg.mxu0
    %1311 = vmatpush.bf16.msra.mxu0 %v779
    %1312 = vmatpush.bf16.msra.mxu0 %v771
    %1313 = vmatpush.bf16.msra.mxu0 %v763
    %1314 = vmatpush.bf16.msra.mxu0 %v755
    %1315 = vmatpush.bf16.msra.mxu0 %v747
    %1316 = vmatpush.bf16.msra.mxu0 %v739
    %1317 = vmatpush.bf16.msra.mxu0 %v731
    %1318 = vmatpush.bf16.msra.mxu0 %v723
    %1319 = vmatmul.bf16.gmra.mxu0 %v263
    %v1320 = vpop.f32.mrf.mxu0
    %v1321 = vadd.f32 %v1308, %v1320
    %v1322 = vpop.f32.mrf.mxu0
    %1323 = vdwg.mxu0
    %1324 = vmatpush.bf16.msra.mxu0 %v708
    %1325 = vmatpush.bf16.msra.mxu0 %v700
    %1326 = vmatpush.bf16.msra.mxu0 %v692
    %1327 = vmatpush.bf16.msra.mxu0 %v684
    %1328 = vmatpush.bf16.msra.mxu0 %v676
    %1329 = vmatpush.bf16.msra.mxu0 %v668
    %1330 = vmatpush.bf16.msra.mxu0 %v660
    %1331 = vmatpush.bf16.msra.mxu0 %v652
    %1332 = vmatmul.bf16.gmra.mxu0 %v266
    %v1333 = vpop.f32.mrf.mxu0
    %v1334 = vadd.f32 0.0, %v1333
    %v1335 = vpop.f32.mrf.mxu0
    %1336 = vdwg.mxu0
    %1337 = vmatpush.bf16.msra.mxu0 %v772
    %1338 = vmatpush.bf16.msra.mxu0 %v764
    %1339 = vmatpush.bf16.msra.mxu0 %v756
    %1340 = vmatpush.bf16.msra.mxu0 %v748
    %1341 = vmatpush.bf16.msra.mxu0 %v740
    %1342 = vmatpush.bf16.msra.mxu0 %v732
    %1343 = vmatpush.bf16.msra.mxu0 %v724
    %1344 = vmatpush.bf16.msra.mxu0 %v716
    %1345 = vmatmul.bf16.gmra.mxu0 %v267
    %v1346 = vpop.f32.mrf.mxu0
    %v1347 = vadd.f32 %v1334, %v1346
    %v1348 = vpop.f32.mrf.mxu0
    %1349 = vdwg.mxu0
    %1350 = vmatpush.bf16.msra.mxu0 %v709
    %1351 = vmatpush.bf16.msra.mxu0 %v701
    %1352 = vmatpush.bf16.msra.mxu0 %v693
    %1353 = vmatpush.bf16.msra.mxu0 %v685
    %1354 = vmatpush.bf16.msra.mxu0 %v677
    %1355 = vmatpush.bf16.msra.mxu0 %v669
    %1356 = vmatpush.bf16.msra.mxu0 %v661
    %1357 = vmatpush.bf16.msra.mxu0 %v653
    %1358 = vmatmul.bf16.gmra.mxu0 %v266
    %v1359 = vpop.f32.mrf.mxu0
    %v1360 = vadd.f32 0.0, %v1359
    %v1361 = vpop.f32.mrf.mxu0
    %1362 = vdwg.mxu0
    %1363 = vmatpush.bf16.msra.mxu0 %v773
    %1364 = vmatpush.bf16.msra.mxu0 %v765
    %1365 = vmatpush.bf16.msra.mxu0 %v757
    %1366 = vmatpush.bf16.msra.mxu0 %v749
    %1367 = vmatpush.bf16.msra.mxu0 %v741
    %1368 = vmatpush.bf16.msra.mxu0 %v733
    %1369 = vmatpush.bf16.msra.mxu0 %v725
    %1370 = vmatpush.bf16.msra.mxu0 %v717
    %1371 = vmatmul.bf16.gmra.mxu0 %v267
    %v1372 = vpop.f32.mrf.mxu0
    %v1373 = vadd.f32 %v1360, %v1372
    %v1374 = vpop.f32.mrf.mxu0
    %1375 = vdwg.mxu0
    %1376 = vmatpush.bf16.msra.mxu0 %v710
    %1377 = vmatpush.bf16.msra.mxu0 %v702
    %1378 = vmatpush.bf16.msra.mxu0 %v694
    %1379 = vmatpush.bf16.msra.mxu0 %v686
    %1380 = vmatpush.bf16.msra.mxu0 %v678
    %1381 = vmatpush.bf16.msra.mxu0 %v670
    %1382 = vmatpush.bf16.msra.mxu0 %v662
    %1383 = vmatpush.bf16.msra.mxu0 %v654
    %1384 = vmatmul.bf16.gmra.mxu0 %v266
    %v1385 = vpop.f32.mrf.mxu0
    %v1386 = vadd.f32 0.0, %v1385
    %v1387 = vpop.f32.mrf.mxu0
    %1388 = vdwg.mxu0
    %1389 = vmatpush.bf16.msra.mxu0 %v774
    %1390 = vmatpush.bf16.msra.mxu0 %v766
    %1391 = vmatpush.bf16.msra.mxu0 %v758
    %1392 = vmatpush.bf16.msra.mxu0 %v750
    %1393 = vmatpush.bf16.msra.mxu0 %v742
    %1394 = vmatpush.bf16.msra.mxu0 %v734
    %1395 = vmatpush.bf16.msra.mxu0 %v726
    %1396 = vmatpush.bf16.msra.mxu0 %v718
    %1397 = vmatmul.bf16.gmra.mxu0 %v267
    %v1398 = vpop.f32.mrf.mxu0
    %v1399 = vadd.f32 %v1386, %v1398
    %v1400 = vpop.f32.mrf.mxu0
    %1401 = vdwg.mxu0
    %1402 = vmatpush.bf16.msra.mxu0 %v711
    %1403 = vmatpush.bf16.msra.mxu0 %v703
    %1404 = vmatpush.bf16.msra.mxu0 %v695
    %1405 = vmatpush.bf16.msra.mxu0 %v687
    %1406 = vmatpush.bf16.msra.mxu0 %v679
    %1407 = vmatpush.bf16.msra.mxu0 %v671
    %1408 = vmatpush.bf16.msra.mxu0 %v663
    %1409 = vmatpush.bf16.msra.mxu0 %v655
    %1410 = vmatmul.bf16.gmra.mxu0 %v266
    %v1411 = vpop.f32.mrf.mxu0
    %v1412 = vadd.f32 0.0, %v1411
    %v1413 = vpop.f32.mrf.mxu0
    %1414 = vdwg.mxu0
    %1415 = vmatpush.bf16.msra.mxu0 %v775
    %1416 = vmatpush.bf16.msra.mxu0 %v767
    %1417 = vmatpush.bf16.msra.mxu0 %v759
    %1418 = vmatpush.bf16.msra.mxu0 %v751
    %1419 = vmatpush.bf16.msra.mxu0 %v743
    %1420 = vmatpush.bf16.msra.mxu0 %v735
    %1421 = vmatpush.bf16.msra.mxu0 %v727
    %1422 = vmatpush.bf16.msra.mxu0 %v719
    %1423 = vmatmul.bf16.gmra.mxu0 %v267
    %v1424 = vpop.f32.mrf.mxu0
    %v1425 = vadd.f32 %v1412, %v1424
    %v1426 = vpop.f32.mrf.mxu0
    %1427 = vdwg.mxu0
    %1428 = vmatpush.bf16.msra.mxu0 %v712
    %1429 = vmatpush.bf16.msra.mxu0 %v704
    %1430 = vmatpush.bf16.msra.mxu0 %v696
    %1431 = vmatpush.bf16.msra.mxu0 %v688
    %1432 = vmatpush.bf16.msra.mxu0 %v680
    %1433 = vmatpush.bf16.msra.mxu0 %v672
    %1434 = vmatpush.bf16.msra.mxu0 %v664
    %1435 = vmatpush.bf16.msra.mxu0 %v656
    %1436 = vmatmul.bf16.gmra.mxu0 %v266
    %v1437 = vpop.f32.mrf.mxu0
    %v1438 = vadd.f32 0.0, %v1437
    %v1439 = vpop.f32.mrf.mxu0
    %1440 = vdwg.mxu0
    %1441 = vmatpush.bf16.msra.mxu0 %v776
    %1442 = vmatpush.bf16.msra.mxu0 %v768
    %1443 = vmatpush.bf16.msra.mxu0 %v760
    %1444 = vmatpush.bf16.msra.mxu0 %v752
    %1445 = vmatpush.bf16.msra.mxu0 %v744
    %1446 = vmatpush.bf16.msra.mxu0 %v736
    %1447 = vmatpush.bf16.msra.mxu0 %v728
    %1448 = vmatpush.bf16.msra.mxu0 %v720
    %1449 = vmatmul.bf16.gmra.mxu0 %v267
    %v1450 = vpop.f32.mrf.mxu0
    %v1451 = vadd.f32 %v1438, %v1450
    %v1452 = vpop.f32.mrf.mxu0
    %1453 = vdwg.mxu0
    %1454 = vmatpush.bf16.msra.mxu0 %v713
    %1455 = vmatpush.bf16.msra.mxu0 %v705
    %1456 = vmatpush.bf16.msra.mxu0 %v697
    %1457 = vmatpush.bf16.msra.mxu0 %v689
    %1458 = vmatpush.bf16.msra.mxu0 %v681
    %1459 = vmatpush.bf16.msra.mxu0 %v673
    %1460 = vmatpush.bf16.msra.mxu0 %v665
    %1461 = vmatpush.bf16.msra.mxu0 %v657
    %1462 = vmatmul.bf16.gmra.mxu0 %v266
    %v1463 = vpop.f32.mrf.mxu0
    %v1464 = vadd.f32 0.0, %v1463
    %v1465 = vpop.f32.mrf.mxu0
    %1466 = vdwg.mxu0
    %1467 = vmatpush.bf16.msra.mxu0 %v777
    %1468 = vmatpush.bf16.msra.mxu0 %v769
    %1469 = vmatpush.bf16.msra.mxu0 %v761
    %1470 = vmatpush.bf16.msra.mxu0 %v753
    %1471 = vmatpush.bf16.msra.mxu0 %v745
    %1472 = vmatpush.bf16.msra.mxu0 %v737
    %1473 = vmatpush.bf16.msra.mxu0 %v729
    %1474 = vmatpush.bf16.msra.mxu0 %v721
    %1475 = vmatmul.bf16.gmra.mxu0 %v267
    %v1476 = vpop.f32.mrf.mxu0
    %v1477 = vadd.f32 %v1464, %v1476
    %v1478 = vpop.f32.mrf.mxu0
    %1479 = vdwg.mxu0
    %1480 = vmatpush.bf16.msra.mxu0 %v714
    %1481 = vmatpush.bf16.msra.mxu0 %v706
    %1482 = vmatpush.bf16.msra.mxu0 %v698
    %1483 = vmatpush.bf16.msra.mxu0 %v690
    %1484 = vmatpush.bf16.msra.mxu0 %v682
    %1485 = vmatpush.bf16.msra.mxu0 %v674
    %1486 = vmatpush.bf16.msra.mxu0 %v666
    %1487 = vmatpush.bf16.msra.mxu0 %v658
    %1488 = vmatmul.bf16.gmra.mxu0 %v266
    %v1489 = vpop.f32.mrf.mxu0
    %v1490 = vadd.f32 0.0, %v1489
    %v1491 = vpop.f32.mrf.mxu0
    %1492 = vdwg.mxu0
    %1493 = vmatpush.bf16.msra.mxu0 %v778
    %1494 = vmatpush.bf16.msra.mxu0 %v770
    %1495 = vmatpush.bf16.msra.mxu0 %v762
    %1496 = vmatpush.bf16.msra.mxu0 %v754
    %1497 = vmatpush.bf16.msra.mxu0 %v746
    %1498 = vmatpush.bf16.msra.mxu0 %v738
    %1499 = vmatpush.bf16.msra.mxu0 %v730
    %1500 = vmatpush.bf16.msra.mxu0 %v722
    %1501 = vmatmul.bf16.gmra.mxu0 %v267
    %v1502 = vpop.f32.mrf.mxu0
    %v1503 = vadd.f32 %v1490, %v1502
    %v1504 = vpop.f32.mrf.mxu0
    %1505 = vdwg.mxu0
    %1506 = vmatpush.bf16.msra.mxu0 %v715
    %1507 = vmatpush.bf16.msra.mxu0 %v707
    %1508 = vmatpush.bf16.msra.mxu0 %v699
    %1509 = vmatpush.bf16.msra.mxu0 %v691
    %1510 = vmatpush.bf16.msra.mxu0 %v683
    %1511 = vmatpush.bf16.msra.mxu0 %v675
    %1512 = vmatpush.bf16.msra.mxu0 %v667
    %1513 = vmatpush.bf16.msra.mxu0 %v659
    %1514 = vmatmul.bf16.gmra.mxu0 %v266
    %v1515 = vpop.f32.mrf.mxu0
    %v1516 = vadd.f32 0.0, %v1515
    %v1517 = vpop.f32.mrf.mxu0
    %1518 = vdwg.mxu0
    %1519 = vmatpush.bf16.msra.mxu0 %v779
    %1520 = vmatpush.bf16.msra.mxu0 %v771
    %1521 = vmatpush.bf16.msra.mxu0 %v763
    %1522 = vmatpush.bf16.msra.mxu0 %v755
    %1523 = vmatpush.bf16.msra.mxu0 %v747
    %1524 = vmatpush.bf16.msra.mxu0 %v739
    %1525 = vmatpush.bf16.msra.mxu0 %v731
    %1526 = vmatpush.bf16.msra.mxu0 %v723
    %1527 = vmatmul.bf16.gmra.mxu0 %v267
    %v1528 = vpop.f32.mrf.mxu0
    %v1529 = vadd.f32 %v1516, %v1528
    %v1530 = vpop.f32.mrf.mxu0
    %1531 = vdwg.mxu0
    %v1532 = vadd.f32 %v1139, %v1347
    %v1533 = vadd.f32 %v1165, %v1373
    %v1534 = vadd.f32 %v1191, %v1399
    %v1535 = vadd.f32 %v1217, %v1425
    %v1536 = vadd.f32 %v1243, %v1451
    %v1537 = vadd.f32 %v1269, %v1477
    %v1538 = vadd.f32 %v1295, %v1503
    %v1539 = vadd.f32 %v1321, %v1529
    %1540 = vmatpush.bf16.msra.mxu0 %v708
    %1541 = vmatpush.bf16.msra.mxu0 %v700
    %1542 = vmatpush.bf16.msra.mxu0 %v692
    %1543 = vmatpush.bf16.msra.mxu0 %v684
    %1544 = vmatpush.bf16.msra.mxu0 %v676
    %1545 = vmatpush.bf16.msra.mxu0 %v668
    %1546 = vmatpush.bf16.msra.mxu0 %v660
    %1547 = vmatpush.bf16.msra.mxu0 %v652
    %1548 = vmatmul.bf16.gmra.mxu0 %v244
    %v1549 = vpop.f32.mrf.mxu0
    %v1550 = vadd.f32 0.0, %v1549
    %v1551 = vpop.f32.mrf.mxu0
    %1552 = vdwg.mxu0
    %1553 = vmatpush.bf16.msra.mxu0 %v772
    %1554 = vmatpush.bf16.msra.mxu0 %v764
    %1555 = vmatpush.bf16.msra.mxu0 %v756
    %1556 = vmatpush.bf16.msra.mxu0 %v748
    %1557 = vmatpush.bf16.msra.mxu0 %v740
    %1558 = vmatpush.bf16.msra.mxu0 %v732
    %1559 = vmatpush.bf16.msra.mxu0 %v724
    %1560 = vmatpush.bf16.msra.mxu0 %v716
    %1561 = vmatmul.bf16.gmra.mxu0 %v245
    %v1562 = vpop.f32.mrf.mxu0
    %v1563 = vadd.f32 %v1550, %v1562
    %v1564 = vpop.f32.mrf.mxu0
    %1565 = vdwg.mxu0
    %1566 = vmatpush.bf16.msra.mxu0 %v709
    %1567 = vmatpush.bf16.msra.mxu0 %v701
    %1568 = vmatpush.bf16.msra.mxu0 %v693
    %1569 = vmatpush.bf16.msra.mxu0 %v685
    %1570 = vmatpush.bf16.msra.mxu0 %v677
    %1571 = vmatpush.bf16.msra.mxu0 %v669
    %1572 = vmatpush.bf16.msra.mxu0 %v661
    %1573 = vmatpush.bf16.msra.mxu0 %v653
    %1574 = vmatmul.bf16.gmra.mxu0 %v244
    %v1575 = vpop.f32.mrf.mxu0
    %v1576 = vadd.f32 0.0, %v1575
    %v1577 = vpop.f32.mrf.mxu0
    %1578 = vdwg.mxu0
    %1579 = vmatpush.bf16.msra.mxu0 %v773
    %1580 = vmatpush.bf16.msra.mxu0 %v765
    %1581 = vmatpush.bf16.msra.mxu0 %v757
    %1582 = vmatpush.bf16.msra.mxu0 %v749
    %1583 = vmatpush.bf16.msra.mxu0 %v741
    %1584 = vmatpush.bf16.msra.mxu0 %v733
    %1585 = vmatpush.bf16.msra.mxu0 %v725
    %1586 = vmatpush.bf16.msra.mxu0 %v717
    %1587 = vmatmul.bf16.gmra.mxu0 %v245
    %v1588 = vpop.f32.mrf.mxu0
    %v1589 = vadd.f32 %v1576, %v1588
    %v1590 = vpop.f32.mrf.mxu0
    %1591 = vdwg.mxu0
    %1592 = vmatpush.bf16.msra.mxu0 %v710
    %1593 = vmatpush.bf16.msra.mxu0 %v702
    %1594 = vmatpush.bf16.msra.mxu0 %v694
    %1595 = vmatpush.bf16.msra.mxu0 %v686
    %1596 = vmatpush.bf16.msra.mxu0 %v678
    %1597 = vmatpush.bf16.msra.mxu0 %v670
    %1598 = vmatpush.bf16.msra.mxu0 %v662
    %1599 = vmatpush.bf16.msra.mxu0 %v654
    %1600 = vmatmul.bf16.gmra.mxu0 %v244
    %v1601 = vpop.f32.mrf.mxu0
    %v1602 = vadd.f32 0.0, %v1601
    %v1603 = vpop.f32.mrf.mxu0
    %1604 = vdwg.mxu0
    %1605 = vmatpush.bf16.msra.mxu0 %v774
    %1606 = vmatpush.bf16.msra.mxu0 %v766
    %1607 = vmatpush.bf16.msra.mxu0 %v758
    %1608 = vmatpush.bf16.msra.mxu0 %v750
    %1609 = vmatpush.bf16.msra.mxu0 %v742
    %1610 = vmatpush.bf16.msra.mxu0 %v734
    %1611 = vmatpush.bf16.msra.mxu0 %v726
    %1612 = vmatpush.bf16.msra.mxu0 %v718
    %1613 = vmatmul.bf16.gmra.mxu0 %v245
    %v1614 = vpop.f32.mrf.mxu0
    %v1615 = vadd.f32 %v1602, %v1614
    %v1616 = vpop.f32.mrf.mxu0
    %1617 = vdwg.mxu0
    %1618 = vmatpush.bf16.msra.mxu0 %v711
    %1619 = vmatpush.bf16.msra.mxu0 %v703
    %1620 = vmatpush.bf16.msra.mxu0 %v695
    %1621 = vmatpush.bf16.msra.mxu0 %v687
    %1622 = vmatpush.bf16.msra.mxu0 %v679
    %1623 = vmatpush.bf16.msra.mxu0 %v671
    %1624 = vmatpush.bf16.msra.mxu0 %v663
    %1625 = vmatpush.bf16.msra.mxu0 %v655
    %1626 = vmatmul.bf16.gmra.mxu0 %v244
    %v1627 = vpop.f32.mrf.mxu0
    %v1628 = vadd.f32 0.0, %v1627
    %v1629 = vpop.f32.mrf.mxu0
    %1630 = vdwg.mxu0
    %1631 = vmatpush.bf16.msra.mxu0 %v775
    %1632 = vmatpush.bf16.msra.mxu0 %v767
    %1633 = vmatpush.bf16.msra.mxu0 %v759
    %1634 = vmatpush.bf16.msra.mxu0 %v751
    %1635 = vmatpush.bf16.msra.mxu0 %v743
    %1636 = vmatpush.bf16.msra.mxu0 %v735
    %1637 = vmatpush.bf16.msra.mxu0 %v727
    %1638 = vmatpush.bf16.msra.mxu0 %v719
    %1639 = vmatmul.bf16.gmra.mxu0 %v245
    %v1640 = vpop.f32.mrf.mxu0
    %v1641 = vadd.f32 %v1628, %v1640
    %v1642 = vpop.f32.mrf.mxu0
    %1643 = vdwg.mxu0
    %1644 = vmatpush.bf16.msra.mxu0 %v712
    %1645 = vmatpush.bf16.msra.mxu0 %v704
    %1646 = vmatpush.bf16.msra.mxu0 %v696
    %1647 = vmatpush.bf16.msra.mxu0 %v688
    %1648 = vmatpush.bf16.msra.mxu0 %v680
    %1649 = vmatpush.bf16.msra.mxu0 %v672
    %1650 = vmatpush.bf16.msra.mxu0 %v664
    %1651 = vmatpush.bf16.msra.mxu0 %v656
    %1652 = vmatmul.bf16.gmra.mxu0 %v244
    %v1653 = vpop.f32.mrf.mxu0
    %v1654 = vadd.f32 0.0, %v1653
    %v1655 = vpop.f32.mrf.mxu0
    %1656 = vdwg.mxu0
    %1657 = vmatpush.bf16.msra.mxu0 %v776
    %1658 = vmatpush.bf16.msra.mxu0 %v768
    %1659 = vmatpush.bf16.msra.mxu0 %v760
    %1660 = vmatpush.bf16.msra.mxu0 %v752
    %1661 = vmatpush.bf16.msra.mxu0 %v744
    %1662 = vmatpush.bf16.msra.mxu0 %v736
    %1663 = vmatpush.bf16.msra.mxu0 %v728
    %1664 = vmatpush.bf16.msra.mxu0 %v720
    %1665 = vmatmul.bf16.gmra.mxu0 %v245
    %v1666 = vpop.f32.mrf.mxu0
    %v1667 = vadd.f32 %v1654, %v1666
    %v1668 = vpop.f32.mrf.mxu0
    %1669 = vdwg.mxu0
    %1670 = vmatpush.bf16.msra.mxu0 %v713
    %1671 = vmatpush.bf16.msra.mxu0 %v705
    %1672 = vmatpush.bf16.msra.mxu0 %v697
    %1673 = vmatpush.bf16.msra.mxu0 %v689
    %1674 = vmatpush.bf16.msra.mxu0 %v681
    %1675 = vmatpush.bf16.msra.mxu0 %v673
    %1676 = vmatpush.bf16.msra.mxu0 %v665
    %1677 = vmatpush.bf16.msra.mxu0 %v657
    %1678 = vmatmul.bf16.gmra.mxu0 %v244
    %v1679 = vpop.f32.mrf.mxu0
    %v1680 = vadd.f32 0.0, %v1679
    %v1681 = vpop.f32.mrf.mxu0
    %1682 = vdwg.mxu0
    %1683 = vmatpush.bf16.msra.mxu0 %v777
    %1684 = vmatpush.bf16.msra.mxu0 %v769
    %1685 = vmatpush.bf16.msra.mxu0 %v761
    %1686 = vmatpush.bf16.msra.mxu0 %v753
    %1687 = vmatpush.bf16.msra.mxu0 %v745
    %1688 = vmatpush.bf16.msra.mxu0 %v737
    %1689 = vmatpush.bf16.msra.mxu0 %v729
    %1690 = vmatpush.bf16.msra.mxu0 %v721
    %1691 = vmatmul.bf16.gmra.mxu0 %v245
    %v1692 = vpop.f32.mrf.mxu0
    %v1693 = vadd.f32 %v1680, %v1692
    %v1694 = vpop.f32.mrf.mxu0
    %1695 = vdwg.mxu0
    %1696 = vmatpush.bf16.msra.mxu0 %v714
    %1697 = vmatpush.bf16.msra.mxu0 %v706
    %1698 = vmatpush.bf16.msra.mxu0 %v698
    %1699 = vmatpush.bf16.msra.mxu0 %v690
    %1700 = vmatpush.bf16.msra.mxu0 %v682
    %1701 = vmatpush.bf16.msra.mxu0 %v674
    %1702 = vmatpush.bf16.msra.mxu0 %v666
    %1703 = vmatpush.bf16.msra.mxu0 %v658
    %1704 = vmatmul.bf16.gmra.mxu0 %v244
    %v1705 = vpop.f32.mrf.mxu0
    %v1706 = vadd.f32 0.0, %v1705
    %v1707 = vpop.f32.mrf.mxu0
    %1708 = vdwg.mxu0
    %1709 = vmatpush.bf16.msra.mxu0 %v778
    %1710 = vmatpush.bf16.msra.mxu0 %v770
    %1711 = vmatpush.bf16.msra.mxu0 %v762
    %1712 = vmatpush.bf16.msra.mxu0 %v754
    %1713 = vmatpush.bf16.msra.mxu0 %v746
    %1714 = vmatpush.bf16.msra.mxu0 %v738
    %1715 = vmatpush.bf16.msra.mxu0 %v730
    %1716 = vmatpush.bf16.msra.mxu0 %v722
    %1717 = vmatmul.bf16.gmra.mxu0 %v245
    %v1718 = vpop.f32.mrf.mxu0
    %v1719 = vadd.f32 %v1706, %v1718
    %v1720 = vpop.f32.mrf.mxu0
    %1721 = vdwg.mxu0
    %1722 = vmatpush.bf16.msra.mxu0 %v715
    %1723 = vmatpush.bf16.msra.mxu0 %v707
    %1724 = vmatpush.bf16.msra.mxu0 %v699
    %1725 = vmatpush.bf16.msra.mxu0 %v691
    %1726 = vmatpush.bf16.msra.mxu0 %v683
    %1727 = vmatpush.bf16.msra.mxu0 %v675
    %1728 = vmatpush.bf16.msra.mxu0 %v667
    %1729 = vmatpush.bf16.msra.mxu0 %v659
    %1730 = vmatmul.bf16.gmra.mxu0 %v244
    %v1731 = vpop.f32.mrf.mxu0
    %v1732 = vadd.f32 0.0, %v1731
    %v1733 = vpop.f32.mrf.mxu0
    %1734 = vdwg.mxu0
    %1735 = vmatpush.bf16.msra.mxu0 %v779
    %1736 = vmatpush.bf16.msra.mxu0 %v771
    %1737 = vmatpush.bf16.msra.mxu0 %v763
    %1738 = vmatpush.bf16.msra.mxu0 %v755
    %1739 = vmatpush.bf16.msra.mxu0 %v747
    %1740 = vmatpush.bf16.msra.mxu0 %v739
    %1741 = vmatpush.bf16.msra.mxu0 %v731
    %1742 = vmatpush.bf16.msra.mxu0 %v723
    %1743 = vmatmul.bf16.gmra.mxu0 %v245
    %v1744 = vpop.f32.mrf.mxu0
    %v1745 = vadd.f32 %v1732, %v1744
    %v1746 = vpop.f32.mrf.mxu0
    %1747 = vdwg.mxu0
    %v1749 = vperm.slane %v97, 0
    %v1750 = vperm.slane %v97, 1
    %v1751 = vperm.slane %v97, 2
    %v1752 = vperm.slane %v97, 3
    %v1753 = vperm.slane %v97, 4
    %v1754 = vperm.slane %v97, 5
    %v1755 = vperm.slane %v97, 6
    %v1756 = vperm.slane %v97, 7
    %vm1765 = vcmp.eq.f32.partialorder %v1563, %v1749
    %vm1766 = vcmp.eq.f32.partialorder %v1589, %v1750
    %vm1767 = vcmp.eq.f32.partialorder %v1615, %v1751
    %vm1768 = vcmp.eq.f32.partialorder %v1641, %v1752
    %vm1769 = vcmp.eq.f32.partialorder %v1667, %v1753
    %vm1770 = vcmp.eq.f32.partialorder %v1693, %v1754
    %vm1771 = vcmp.eq.f32.partialorder %v1719, %v1755
    %vm1772 = vcmp.eq.f32.partialorder %v1745, %v1756
    %v1773 = vsel %vm1765, %v1532, 0.0
    %v1774 = vsel %vm1766, %v1533, 0.0
    %v1775 = vsel %vm1767, %v1534, 0.0
    %v1776 = vsel %vm1768, %v1535, 0.0
    %v1777 = vsel %vm1769, %v1536, 0.0
    %v1778 = vsel %vm1770, %v1537, 0.0
    %v1779 = vsel %vm1771, %v1538, 0.0
    %v1780 = vsel %vm1772, %v1539, 0.0
    %1781 = vst [vmem:[#allocation11] sm:$0xff] %v1773
    %1782 = vst [vmem:[#allocation11 + $0x8] sm:$0xff] %v1774
    %1783 = vst [vmem:[#allocation11 + $0x10] sm:$0xff] %v1775
    %1784 = vst [vmem:[#allocation11 + $0x18] sm:$0xff] %v1776
    %1785 = vst [vmem:[#allocation11 + $0x20] sm:$0xff] %v1777
    %1786 = vst [vmem:[#allocation11 + $0x28] sm:$0xff] %v1778
    %1787 = vst [vmem:[#allocation11 + $0x30] sm:$0xff] %v1779
    %1788 = vst [vmem:[#allocation11 + $0x38] sm:$0xff] %v1780
    // Predicated region
    $region42: #{tpu_custom_call.1} parent=1 // pred_check
      _
    $region43: #{tpu_custom_call.1} parent=1 // pred_check_branch
      %1790 = sbr.rel (0) target = $region45
    $region44: #{tpu_custom_call.1} parent=1 // pred_region
      %1792 = vsyncadd [#allocation4], 0
      %s1794 = sshll.u32 [#allocation11], 4
      %s1795 = int_to_ptr.vmem [resolvable:$true] %s1794
      %s1796 = sshll.u32 %s5, 4
      %s1797 = int_to_ptr.hbm [resolvable:$true] %s1796
      %1799 = dma.vmem_to_hbm [thread:$0]  %s1795, 1024, %s1797, [#allocation4]
    $region45: #{tpu_custom_call.1} parent=1 // pred_fallthru
      _
    // Predicated region
    $region46: #{tpu_custom_call.1} parent=1 // pred_check
      _
    $region47: #{tpu_custom_call.1} parent=1 // pred_check_branch
      %1801 = sbr.rel (0) target = $region49
    $region48: #{tpu_custom_call.1} parent=1 // pred_region
      %1803 = dma.done [#allocation4], 1024
    $region49: #{tpu_custom_call.1} parent=1 // pred_fallthru
      _
    %1804 = vsyncpa [#allocation3], 1
    %1805 = vsyncpa [#allocation6], 1
    %1806 = vsyncpa [#allocation9], 1
    %1807 = vsyncpa [#allocation4], 1

</llo_original>
